<compile_context>
chip_gen: v6e
topology: v6e:2x2x1
jax: 0.10.0
libtpu: 0.0.40
codegen_flags: <defaults>
</compile_context>

<pallas_src>
import jax
import jax.numpy as jnp
import numpy as np
from jax import lax
from jax.experimental import pallas as pl
from jax.experimental.pallas import tpu as pltpu


def bilstm_kernel(emb_f_ref, emb_b_ref,                 # (Tc, Bb, E) fwd / bwd time chunks
                  wih_f_ref, whh_f_ref, b_f_ref,        # forward-dir LSTM params
                  wih_b_ref, whh_b_ref, b_b_ref,        # backward-dir LSTM params
                  wlin_ref, blin_ref,                   # Linear(4H -> H)
                  out_ref,                              # (Bb, H)
                  h_f_ref, c_f_ref, h_b_ref, c_b_ref,   # VMEM scratch (Bb, H)
                  s_f_ref, s_b_ref, m_f_ref, m_b_ref):  # VMEM scratch (Bb, H)
    Tc, Bb, E = emb_f_ref.shape
    H = whh_f_ref.shape[0]                              # W_hh^T is (H, 4H)
    j = pl.program_id(1)
    nt = pl.num_programs(1)

    # ---------------- init persistent state at the first time-chunk ----------------
    @pl.when(j == 0)
    def _():
        for r in (h_f_ref, c_f_ref, h_b_ref, c_b_ref, s_f_ref, s_b_ref):
            r[...] = jnp.zeros_like(r)
        m_f_ref[...] = jnp.full_like(m_f_ref, -jnp.inf)
        m_b_ref[...] = jnp.full_like(m_b_ref, -jnp.inf)

    # ------- hoisted input projection: one big MXU matmul per direction/chunk ------
    # (Tc*Bb, E) @ (E, 4H) with the bias folded in once (removed from the serial chain).
    x_f = emb_f_ref[...].reshape(Tc * Bb, E)
    x_b = emb_b_ref[...].reshape(Tc * Bb, E)
    xg_f = jnp.dot(x_f, wih_f_ref[...], preferred_element_type=jnp.float32) + b_f_ref[...]
    xg_b = jnp.dot(x_b, wih_b_ref[...], preferred_element_type=jnp.float32) + b_b_ref[...]

    whh_f = whh_f_ref[...]
    whh_b = whh_b_ref[...]

    hf = h_f_ref[...]; cf = c_f_ref[...]
    hb = h_b_ref[...]; cb = c_b_ref[...]
    sf = s_f_ref[...]; sb = s_b_ref[...]
    mf = m_f_ref[...]; mb = m_b_ref[...]

    # -------- fused fwd/bwd recurrence, fully unrolled over the time chunk ---------
    for i in range(Tc):
        rf = i * Bb                      # forward: local time i
        rb = (Tc - 1 - i) * Bb           # backward: local time Tc-1-i (global time reversed)
        g_f = xg_f[rf:rf + Bb, :] + jnp.dot(hf, whh_f, preferred_element_type=jnp.float32)
        g_b = xg_b[rb:rb + Bb, :] + jnp.dot(hb, whh_b, preferred_element_type=jnp.float32)

        # Lane-dense EUP ops on the full (Bb, 4H) gate tile; slices below are cheap VPU.
        sg_f = jax.nn.sigmoid(g_f); th_f = jnp.tanh(g_f)
        sg_b = jax.nn.sigmoid(g_b); th_b = jnp.tanh(g_b)

        cf = sg_f[:, H:2 * H] * cf + sg_f[:, 0:H] * th_f[:, 2 * H:3 * H]
        cb = sg_b[:, H:2 * H] * cb + sg_b[:, 0:H] * th_b[:, 2 * H:3 * H]
        hf = sg_f[:, 3 * H:4 * H] * jnp.tanh(cf)
        hb = sg_b[:, 3 * H:4 * H] * jnp.tanh(cb)

        sf = sf + hf
        sb = sb + hb
        mf = jnp.maximum(mf, hf)
        mb = jnp.maximum(mb, hb)

    h_f_ref[...] = hf; c_f_ref[...] = cf
    h_b_ref[...] = hb; c_b_ref[...] = cb
    s_f_ref[...] = sf; s_b_ref[...] = sb
    m_f_ref[...] = mf; m_b_ref[...] = mb

    # ----------------------- finalize: pool, classify, ReLU ------------------------
    @pl.when(j == nt - 1)
    def _():
        inv_t = 1.0 / (Tc * nt)
        avg_f = sf * inv_t
        avg_b = sb * inv_t
        wlin = wlin_ref[...]
        # conc = [avg_f, avg_b, max_f, max_b]; use partial-sum dots instead of a concat.
        lin = (jnp.dot(avg_f, wlin[0:H, :], preferred_element_type=jnp.float32)
               + jnp.dot(avg_b, wlin[H:2 * H, :], preferred_element_type=jnp.float32)
               + jnp.dot(mf, wlin[2 * H:3 * H, :], preferred_element_type=jnp.float32)
               + jnp.dot(mb, wlin[3 * H:4 * H, :], preferred_element_type=jnp.float32)
               + blin_ref[...])
        # Dropout is identity in the deterministic/eval forward.
        out_ref[...] = jnp.maximum(lin, 0.0)


def bilstm_forward(x_tokens, params, *, time_block=None, batch_block=None):
    # Embedding lookup (glue, plain JAX gather outside the kernel).
    emb = jnp.take(params["embedding"], x_tokens, axis=0)              # (B, T, E)
    emb_tm = jnp.transpose(emb, (1, 0, 2)).astype(jnp.float32)         # (T, B, E)
    T, B, E = emb_tm.shape
    H = params["hidden_size"]

    Tc = time_block if time_block is not None else T
    bb = batch_block if batch_block is not None else B
    assert T % Tc == 0 and B % bb == 0
    assert bb == B or bb % 8 == 0
    nt = T // Tc
    nb = B // bb

    weights = (params["wih_f_T"], params["whh_f_T"], params["b_f"],
               params["wih_b_T"], params["whh_b_T"], params["b_b"],
               params["wlin_T"], params["blin"])

    def full_spec(arr):
        return pl.BlockSpec(arr.shape, lambda i, j, n=arr.ndim: (0,) * n)

    in_specs = (
        [pl.BlockSpec((Tc, bb, E), lambda i, j: (j, i, 0)),                        # fwd chunks
         pl.BlockSpec((Tc, bb, E), lambda i, j, _nt=nt: (_nt - 1 - j, i, 0))]      # bwd chunks
        + [full_spec(w) for w in weights])

    grid_spec = pltpu.PrefetchScalarGridSpec(
        num_scalar_prefetch=0,
        grid=(nb, nt),
        in_specs=in_specs,
        out_specs=pl.BlockSpec((bb, H), lambda i, j: (i, 0)),
        scratch_shapes=[pltpu.VMEM((bb, H), jnp.float32)] * 8,
    )

    return pl.pallas_call(
        bilstm_kernel,
        out_shape=jax.ShapeDtypeStruct((B, H), jnp.float32),
        grid_spec=grid_spec,
        compiler_params=pltpu.CompilerParams(
            dimension_semantics=("parallel", "arbitrary")),
    )(emb_tm, emb_tm, *weights)


def bilstm_reference(x_tokens, params):
    """Pure-JAX reference matching PyTorch nn.LSTM(bidirectional, batch_first)."""
    emb = jnp.take(params["embedding"], x_tokens, axis=0).astype(jnp.float32)  # (B, T, E)
    B, T, _ = emb.shape
    H = params["hidden_size"]

    def run(wih_T, whh_T, b, reverse):
        seq = emb[:, ::-1, :] if reverse else emb
        h = jnp.zeros((B, H), jnp.float32)
        c = jnp.zeros((B, H), jnp.float32)
        hs = []
        for t in range(T):
            g = seq[:, t, :] @ wih_T + h @ whh_T + b
            i_g = jax.nn.sigmoid(g[:, 0:H])
            f_g = jax.nn.sigmoid(g[:, H:2 * H])
            g_g = jnp.tanh(g[:, 2 * H:3 * H])
            o_g = jax.nn.sigmoid(g[:, 3 * H:4 * H])
            c = f_g * c + i_g * g_g
            h = o_g * jnp.tanh(c)
            hs.append(h)
        hs = jnp.stack(hs, axis=1)                                     # (B, T, H)
        return hs[:, ::-1, :] if reverse else hs

    h_f = run(params["wih_f_T"], params["whh_f_T"], params["b_f"], False)
    h_b = run(params["wih_b_T"], params["whh_b_T"], params["b_b"], True)
    h_lstm = jnp.concatenate([h_f, h_b], axis=-1)                      # (B, T, 2H)
    avg_pool = jnp.mean(h_lstm, axis=1)
    max_pool = jnp.max(h_lstm, axis=1)
    conc = jnp.concatenate([avg_pool, max_pool], axis=1)               # (B, 4H)
    return jnp.maximum(conc @ params["wlin_T"] + params["blin"], 0.0)


def make_params(vocab_size, embedding_dim, hidden_size, key):
    E, H = embedding_dim, hidden_size
    ks = jax.random.split(key, 12)
    bound = 1.0 / np.sqrt(H)
    u = lambda k, shape: jax.random.uniform(k, shape, jnp.float32, -bound, bound)

    emb = jax.random.normal(ks[0], (vocab_size, E), jnp.float32) * 0.1
    emb = emb.at[0].set(0.0)   # padding_idx row

    wih_f = u(ks[1], (4 * H, E)); whh_f = u(ks[2], (4 * H, H))
    bih_f = u(ks[3], (4 * H,));   bhh_f = u(ks[4], (4 * H,))
    wih_b = u(ks[5], (4 * H, E)); whh_b = u(ks[6], (4 * H, H))
    bih_b = u(ks[7], (4 * H,));   bhh_b = u(ks[8], (4 * H,))

    bound_lin = 1.0 / np.sqrt(4 * H)
    wlin = jax.random.uniform(ks[9], (H, 4 * H), jnp.float32, -bound_lin, bound_lin)
    blin = jax.random.uniform(ks[10], (H,), jnp.float32, -bound_lin, bound_lin)

    return {
        "hidden_size": H,
        "embedding": emb,
        "wih_f_T": wih_f.T, "whh_f_T": whh_f.T, "b_f": (bih_f + bhh_f)[None, :],
        "wih_b_T": wih_b.T, "whh_b_T": whh_b.T, "b_b": (bih_b + bhh_b)[None, :],
        "wlin_T": wlin.T, "blin": blin[None, :],
    }


if __name__ == "__main__":
    vocab_size, embedding_dim, hidden_size = 50, 32, 32
    B, T = 8, 8

    key = jax.random.PRNGKey(0)
    k_tok, k_par = jax.random.split(key)
    params = make_params(vocab_size, embedding_dim, hidden_size, k_par)
    x = jax.random.randint(k_tok, (B, T), 0, vocab_size, dtype=jnp.int32)

    # time_block=4 exercises the streamed time-chunk grid (2 chunks of 4 steps).
    out = bilstm_forward(x, params, time_block=4)
    out = jax.block_until_ready(out)

    ref = bilstm_reference(x, params)
    np.testing.assert_allclose(np.asarray(out), np.asarray(ref), rtol=1e-4, atol=1e-5)

    print("KERNEL_OK")
</pallas_src>

<mosaic_0001>
module attributes {stable_mosaic.version = 11 : i64} {
  func.func @bilstm_kernel(%arg0: i32, %arg1: i32, %arg2: memref<4x8x32xf32, #tpu.memory_space<vmem>>, %arg3: memref<4x8x32xf32, #tpu.memory_space<vmem>>, %arg4: memref<32x128xf32, #tpu.memory_space<vmem>>, %arg5: memref<32x128xf32, #tpu.memory_space<vmem>>, %arg6: memref<1x128xf32, #tpu.memory_space<vmem>>, %arg7: memref<32x128xf32, #tpu.memory_space<vmem>>, %arg8: memref<32x128xf32, #tpu.memory_space<vmem>>, %arg9: memref<1x128xf32, #tpu.memory_space<vmem>>, %arg10: memref<128x32xf32, #tpu.memory_space<vmem>>, %arg11: memref<1x32xf32, #tpu.memory_space<vmem>>, %arg12: memref<8x32xf32, #tpu.memory_space<vmem>>, %arg13: memref<8x32xf32, #tpu.memory_space<vmem>>, %arg14: memref<8x32xf32, #tpu.memory_space<vmem>>, %arg15: memref<8x32xf32, #tpu.memory_space<vmem>>, %arg16: memref<8x32xf32, #tpu.memory_space<vmem>>, %arg17: memref<8x32xf32, #tpu.memory_space<vmem>>, %arg18: memref<8x32xf32, #tpu.memory_space<vmem>>, %arg19: memref<8x32xf32, #tpu.memory_space<vmem>>, %arg20: memref<8x32xf32, #tpu.memory_space<vmem>>) attributes {dimension_semantics = [#tpu.dimension_semantics<parallel>, #tpu.dimension_semantics<arbitrary>], iteration_bounds = array<i64: 1, 2>, scalar_prefetch = 0 : i64, scratch_operands = 8 : i64, tpu.core_type = #tpu.core_type<tc>, window_params = [{transform_indices = @transform_0, window_bounds = array<i64: 4, 8, 32>}, {transform_indices = @transform_1, window_bounds = array<i64: 4, 8, 32>}, {pipeline_mode = #tpu.pipeline_mode<synchronous>, transform_indices = @transform_2, window_bounds = array<i64: 32, 128>}, {pipeline_mode = #tpu.pipeline_mode<synchronous>, transform_indices = @transform_3, window_bounds = array<i64: 32, 128>}, {pipeline_mode = #tpu.pipeline_mode<synchronous>, transform_indices = @transform_4, window_bounds = array<i64: 1, 128>}, {pipeline_mode = #tpu.pipeline_mode<synchronous>, transform_indices = @transform_5, window_bounds = array<i64: 32, 128>}, {pipeline_mode = #tpu.pipeline_mode<synchronous>, transform_indices = @transform_6, window_bounds = array<i64: 32, 128>}, {pipeline_mode = #tpu.pipeline_mode<synchronous>, transform_indices = @transform_7, window_bounds = array<i64: 1, 128>}, {pipeline_mode = #tpu.pipeline_mode<synchronous>, transform_indices = @transform_8, window_bounds = array<i64: 128, 32>}, {pipeline_mode = #tpu.pipeline_mode<synchronous>, transform_indices = @transform_9, window_bounds = array<i64: 1, 32>}, {transform_indices = @transform_10, window_bounds = array<i64: 8, 32>}]} {
    %c0_i32 = arith.constant 0 : i32
    %0 = arith.cmpi eq, %arg1, %c0_i32 : i32
    %1 = arith.extui %0 : i1 to i32
    %c0_i32_0 = arith.constant 0 : i32
    %2 = arith.cmpi ne, %1, %c0_i32_0 : i32
    scf.if %2 {
      %cst_68 = arith.constant 0.000000e+00 : f32
      %198 = vector.broadcast %cst_68 : f32 to vector<8x32xf32>
      %c0_69 = arith.constant 0 : index
      %c0_70 = arith.constant 0 : index
      %199 = vector.load %arg13[%c0_69, %c0_70] : memref<8x32xf32, #tpu.memory_space<vmem>>, vector<8x32xf32>
      tpu.vector_store %arg13[%c0_69, %c0_70], %198 {strides = array<i32>} : memref<8x32xf32, #tpu.memory_space<vmem>>, vector<8x32xf32>,
      %cst_71 = arith.constant 0.000000e+00 : f32
      %200 = vector.broadcast %cst_71 : f32 to vector<8x32xf32>
      %c0_72 = arith.constant 0 : index
      %c0_73 = arith.constant 0 : index
      %201 = vector.load %arg14[%c0_72, %c0_73] : memref<8x32xf32, #tpu.memory_space<vmem>>, vector<8x32xf32>
      tpu.vector_store %arg14[%c0_72, %c0_73], %200 {strides = array<i32>} : memref<8x32xf32, #tpu.memory_space<vmem>>, vector<8x32xf32>,
      %cst_74 = arith.constant 0.000000e+00 : f32
      %202 = vector.broadcast %cst_74 : f32 to vector<8x32xf32>
      %c0_75 = arith.constant 0 : index
      %c0_76 = arith.constant 0 : index
      %203 = vector.load %arg15[%c0_75, %c0_76] : memref<8x32xf32, #tpu.memory_space<vmem>>, vector<8x32xf32>
      tpu.vector_store %arg15[%c0_75, %c0_76], %202 {strides = array<i32>} : memref<8x32xf32, #tpu.memory_space<vmem>>, vector<8x32xf32>,
      %cst_77 = arith.constant 0.000000e+00 : f32
      %204 = vector.broadcast %cst_77 : f32 to vector<8x32xf32>
      %c0_78 = arith.constant 0 : index
      %c0_79 = arith.constant 0 : index
      %205 = vector.load %arg16[%c0_78, %c0_79] : memref<8x32xf32, #tpu.memory_space<vmem>>, vector<8x32xf32>
      tpu.vector_store %arg16[%c0_78, %c0_79], %204 {strides = array<i32>} : memref<8x32xf32, #tpu.memory_space<vmem>>, vector<8x32xf32>,
      %cst_80 = arith.constant 0.000000e+00 : f32
      %206 = vector.broadcast %cst_80 : f32 to vector<8x32xf32>
      %c0_81 = arith.constant 0 : index
      %c0_82 = arith.constant 0 : index
      %207 = vector.load %arg17[%c0_81, %c0_82] : memref<8x32xf32, #tpu.memory_space<vmem>>, vector<8x32xf32>
      tpu.vector_store %arg17[%c0_81, %c0_82], %206 {strides = array<i32>} : memref<8x32xf32, #tpu.memory_space<vmem>>, vector<8x32xf32>,
      %cst_83 = arith.constant 0.000000e+00 : f32
      %208 = vector.broadcast %cst_83 : f32 to vector<8x32xf32>
      %c0_84 = arith.constant 0 : index
      %c0_85 = arith.constant 0 : index
      %209 = vector.load %arg18[%c0_84, %c0_85] : memref<8x32xf32, #tpu.memory_space<vmem>>, vector<8x32xf32>
      tpu.vector_store %arg18[%c0_84, %c0_85], %208 {strides = array<i32>} : memref<8x32xf32, #tpu.memory_space<vmem>>, vector<8x32xf32>,
      %cst_86 = arith.constant 0xFF800000 : f32
      %210 = vector.broadcast %cst_86 : f32 to vector<8x32xf32>
      %c0_87 = arith.constant 0 : index
      %c0_88 = arith.constant 0 : index
      %211 = vector.load %arg19[%c0_87, %c0_88] : memref<8x32xf32, #tpu.memory_space<vmem>>, vector<8x32xf32>
      tpu.vector_store %arg19[%c0_87, %c0_88], %210 {strides = array<i32>} : memref<8x32xf32, #tpu.memory_space<vmem>>, vector<8x32xf32>,
      %cst_89 = arith.constant 0xFF800000 : f32
      %212 = vector.broadcast %cst_89 : f32 to vector<8x32xf32>
      %c0_90 = arith.constant 0 : index
      %c0_91 = arith.constant 0 : index
      %213 = vector.load %arg20[%c0_90, %c0_91] : memref<8x32xf32, #tpu.memory_space<vmem>>, vector<8x32xf32>
      tpu.vector_store %arg20[%c0_90, %c0_91], %212 {strides = array<i32>} : memref<8x32xf32, #tpu.memory_space<vmem>>, vector<8x32xf32>,
    } else {
    }
    %c0 = arith.constant 0 : index
    %c0_1 = arith.constant 0 : index
    %c0_2 = arith.constant 0 : index
    %3 = vector.load %arg2[%c0, %c0_1, %c0_2] : memref<4x8x32xf32, #tpu.memory_space<vmem>>, vector<4x8x32xf32>
    %4 = vector.shape_cast %3 : vector<4x8x32xf32> to vector<32x32xf32>
    %c0_3 = arith.constant 0 : index
    %c0_4 = arith.constant 0 : index
    %c0_5 = arith.constant 0 : index
    %5 = vector.load %arg3[%c0_3, %c0_4, %c0_5] : memref<4x8x32xf32, #tpu.memory_space<vmem>>, vector<4x8x32xf32>
    %6 = vector.shape_cast %5 : vector<4x8x32xf32> to vector<32x32xf32>
    %c0_6 = arith.constant 0 : index
    %c0_7 = arith.constant 0 : index
    %7 = vector.load %arg4[%c0_6, %c0_7] : memref<32x128xf32, #tpu.memory_space<vmem>>, vector<32x128xf32>
    %cst = arith.constant dense<0.000000e+00> : vector<32x128xf32>
    %8 = tpu.matmul %4, %7, %cst {dimension_numbers = #tpu.dot_dimension_numbers<[1], [0], [0], [1], [0, 0, 1, 1], [], []>} : vector<32x32xf32>, vector<32x128xf32>, vector<32x128xf32> -> vector<32x128xf32>
    %c0_8 = arith.constant 0 : index
    %c0_9 = arith.constant 0 : index
    %9 = vector.load %arg6[%c0_8, %c0_9] : memref<1x128xf32, #tpu.memory_space<vmem>>, vector<1x128xf32>
    %10 = vector.broadcast %9 : vector<1x128xf32> to vector<32x128xf32>
    %11 = arith.addf %8, %10 : vector<32x128xf32>
    %c0_10 = arith.constant 0 : index
    %c0_11 = arith.constant 0 : index
    %12 = vector.load %arg7[%c0_10, %c0_11] : memref<32x128xf32, #tpu.memory_space<vmem>>, vector<32x128xf32>
    %cst_12 = arith.constant dense<0.000000e+00> : vector<32x128xf32>
    %13 = tpu.matmul %6, %12, %cst_12 {dimension_numbers = #tpu.dot_dimension_numbers<[1], [0], [0], [1], [0, 0, 1, 1], [], []>} : vector<32x32xf32>, vector<32x128xf32>, vector<32x128xf32> -> vector<32x128xf32>
    %c0_13 = arith.constant 0 : index
    %c0_14 = arith.constant 0 : index
    %14 = vector.load %arg9[%c0_13, %c0_14] : memref<1x128xf32, #tpu.memory_space<vmem>>, vector<1x128xf32>
    %15 = vector.broadcast %14 : vector<1x128xf32> to vector<32x128xf32>
    %16 = arith.addf %13, %15 : vector<32x128xf32>
    %c0_15 = arith.constant 0 : index
    %c0_16 = arith.constant 0 : index
    %17 = vector.load %arg5[%c0_15, %c0_16] : memref<32x128xf32, #tpu.memory_space<vmem>>, vector<32x128xf32>
    %c0_17 = arith.constant 0 : index
    %c0_18 = arith.constant 0 : index
    %18 = vector.load %arg8[%c0_17, %c0_18] : memref<32x128xf32, #tpu.memory_space<vmem>>, vector<32x128xf32>
    %c0_19 = arith.constant 0 : index
    %c0_20 = arith.constant 0 : index
    %19 = vector.load %arg13[%c0_19, %c0_20] : memref<8x32xf32, #tpu.memory_space<vmem>>, vector<8x32xf32>
    %c0_21 = arith.constant 0 : index
    %c0_22 = arith.constant 0 : index
    %20 = vector.load %arg14[%c0_21, %c0_22] : memref<8x32xf32, #tpu.memory_space<vmem>>, vector<8x32xf32>
    %c0_23 = arith.constant 0 : index
    %c0_24 = arith.constant 0 : index
    %21 = vector.load %arg15[%c0_23, %c0_24] : memref<8x32xf32, #tpu.memory_space<vmem>>, vector<8x32xf32>
    %c0_25 = arith.constant 0 : index
    %c0_26 = arith.constant 0 : index
    %22 = vector.load %arg16[%c0_25, %c0_26] : memref<8x32xf32, #tpu.memory_space<vmem>>, vector<8x32xf32>
    %c0_27 = arith.constant 0 : index
    %c0_28 = arith.constant 0 : index
    %23 = vector.load %arg17[%c0_27, %c0_28] : memref<8x32xf32, #tpu.memory_space<vmem>>, vector<8x32xf32>
    %c0_29 = arith.constant 0 : index
    %c0_30 = arith.constant 0 : index
    %24 = vector.load %arg18[%c0_29, %c0_30] : memref<8x32xf32, #tpu.memory_space<vmem>>, vector<8x32xf32>
    %c0_31 = arith.constant 0 : index
    %c0_32 = arith.constant 0 : index
    %25 = vector.load %arg19[%c0_31, %c0_32] : memref<8x32xf32, #tpu.memory_space<vmem>>, vector<8x32xf32>
    %c0_33 = arith.constant 0 : index
    %c0_34 = arith.constant 0 : index
    %26 = vector.load %arg20[%c0_33, %c0_34] : memref<8x32xf32, #tpu.memory_space<vmem>>, vector<8x32xf32>
    %27 = vector.extract_strided_slice %11 {offsets = [0, 0], sizes = [8, 128], strides = [1, 1]} : vector<32x128xf32> to vector<8x128xf32>
    %cst_35 = arith.constant dense<0.000000e+00> : vector<8x128xf32>
    %28 = tpu.matmul %19, %17, %cst_35 {dimension_numbers = #tpu.dot_dimension_numbers<[1], [0], [0], [1], [0, 0, 1, 1], [], []>} : vector<8x32xf32>, vector<32x128xf32>, vector<8x128xf32> -> vector<8x128xf32>
    %29 = arith.addf %27, %28 : vector<8x128xf32>
    %30 = vector.extract_strided_slice %16 {offsets = [24, 0], sizes = [8, 128], strides = [1, 1]} : vector<32x128xf32> to vector<8x128xf32>
    %cst_36 = arith.constant dense<0.000000e+00> : vector<8x128xf32>
    %31 = tpu.matmul %21, %18, %cst_36 {dimension_numbers = #tpu.dot_dimension_numbers<[1], [0], [0], [1], [0, 0, 1, 1], [], []>} : vector<8x32xf32>, vector<32x128xf32>, vector<8x128xf32> -> vector<8x128xf32>
    %32 = arith.addf %30, %31 : vector<8x128xf32>
    %33 = arith.negf %29 : vector<8x128xf32>
    %34 = math.exp %33 : vector<8x128xf32>
    %cst_37 = arith.constant 1.000000e+00 : f32
    %35 = vector.broadcast %cst_37 : f32 to vector<8x128xf32>
    %36 = arith.addf %35, %34 : vector<8x128xf32>
    %37 = arith.divf %35, %36 : vector<8x128xf32>
    %38 = math.tanh %29 : vector<8x128xf32>
    %39 = arith.negf %32 : vector<8x128xf32>
    %40 = math.exp %39 : vector<8x128xf32>
    %cst_38 = arith.constant 1.000000e+00 : f32
    %41 = vector.broadcast %cst_38 : f32 to vector<8x128xf32>
    %42 = arith.addf %41, %40 : vector<8x128xf32>
    %43 = arith.divf %41, %42 : vector<8x128xf32>
    %44 = math.tanh %32 : vector<8x128xf32>
    %45 = vector.extract_strided_slice %37 {offsets = [0, 32], sizes = [8, 32], strides = [1, 1]} : vector<8x128xf32> to vector<8x32xf32>
    %46 = arith.mulf %45, %20 : vector<8x32xf32>
    %47 = vector.extract_strided_slice %37 {offsets = [0, 0], sizes = [8, 32], strides = [1, 1]} : vector<8x128xf32> to vector<8x32xf32>
    %48 = vector.extract_strided_slice %38 {offsets = [0, 64], sizes = [8, 32], strides = [1, 1]} : vector<8x128xf32> to vector<8x32xf32>
    %49 = arith.mulf %47, %48 : vector<8x32xf32>
    %50 = arith.addf %46, %49 : vector<8x32xf32>
    %51 = vector.extract_strided_slice %43 {offsets = [0, 32], sizes = [8, 32], strides = [1, 1]} : vector<8x128xf32> to vector<8x32xf32>
    %52 = arith.mulf %51, %22 : vector<8x32xf32>
    %53 = vector.extract_strided_slice %43 {offsets = [0, 0], sizes = [8, 32], strides = [1, 1]} : vector<8x128xf32> to vector<8x32xf32>
    %54 = vector.extract_strided_slice %44 {offsets = [0, 64], sizes = [8, 32], strides = [1, 1]} : vector<8x128xf32> to vector<8x32xf32>
    %55 = arith.mulf %53, %54 : vector<8x32xf32>
    %56 = arith.addf %52, %55 : vector<8x32xf32>
    %57 = vector.extract_strided_slice %37 {offsets = [0, 96], sizes = [8, 32], strides = [1, 1]} : vector<8x128xf32> to vector<8x32xf32>
    %58 = math.tanh %50 : vector<8x32xf32>
    %59 = arith.mulf %57, %58 : vector<8x32xf32>
    %60 = vector.extract_strided_slice %43 {offsets = [0, 96], sizes = [8, 32], strides = [1, 1]} : vector<8x128xf32> to vector<8x32xf32>
    %61 = math.tanh %56 : vector<8x32xf32>
    %62 = arith.mulf %60, %61 : vector<8x32xf32>
    %63 = arith.addf %23, %59 : vector<8x32xf32>
    %64 = arith.addf %24, %62 : vector<8x32xf32>
    %65 = arith.maximumf %25, %59 : vector<8x32xf32>
    %66 = arith.maximumf %26, %62 : vector<8x32xf32>
    %67 = vector.extract_strided_slice %11 {offsets = [8, 0], sizes = [8, 128], strides = [1, 1]} : vector<32x128xf32> to vector<8x128xf32>
    %cst_39 = arith.constant dense<0.000000e+00> : vector<8x128xf32>
    %68 = tpu.matmul %59, %17, %cst_39 {dimension_numbers = #tpu.dot_dimension_numbers<[1], [0], [0], [1], [0, 0, 1, 1], [], []>} : vector<8x32xf32>, vector<32x128xf32>, vector<8x128xf32> -> vector<8x128xf32>
    %69 = arith.addf %67, %68 : vector<8x128xf32>
    %70 = vector.extract_strided_slice %16 {offsets = [16, 0], sizes = [8, 128], strides = [1, 1]} : vector<32x128xf32> to vector<8x128xf32>
    %cst_40 = arith.constant dense<0.000000e+00> : vector<8x128xf32>
    %71 = tpu.matmul %62, %18, %cst_40 {dimension_numbers = #tpu.dot_dimension_numbers<[1], [0], [0], [1], [0, 0, 1, 1], [], []>} : vector<8x32xf32>, vector<32x128xf32>, vector<8x128xf32> -> vector<8x128xf32>
    %72 = arith.addf %70, %71 : vector<8x128xf32>
    %73 = arith.negf %69 : vector<8x128xf32>
    %74 = math.exp %73 : vector<8x128xf32>
    %cst_41 = arith.constant 1.000000e+00 : f32
    %75 = vector.broadcast %cst_41 : f32 to vector<8x128xf32>
    %76 = arith.addf %75, %74 : vector<8x128xf32>
    %77 = arith.divf %75, %76 : vector<8x128xf32>
    %78 = math.tanh %69 : vector<8x128xf32>
    %79 = arith.negf %72 : vector<8x128xf32>
    %80 = math.exp %79 : vector<8x128xf32>
    %cst_42 = arith.constant 1.000000e+00 : f32
    %81 = vector.broadcast %cst_42 : f32 to vector<8x128xf32>
    %82 = arith.addf %81, %80 : vector<8x128xf32>
    %83 = arith.divf %81, %82 : vector<8x128xf32>
    %84 = math.tanh %72 : vector<8x128xf32>
    %85 = vector.extract_strided_slice %77 {offsets = [0, 32], sizes = [8, 32], strides = [1, 1]} : vector<8x128xf32> to vector<8x32xf32>
    %86 = arith.mulf %85, %50 : vector<8x32xf32>
    %87 = vector.extract_strided_slice %77 {offsets = [0, 0], sizes = [8, 32], strides = [1, 1]} : vector<8x128xf32> to vector<8x32xf32>
    %88 = vector.extract_strided_slice %78 {offsets = [0, 64], sizes = [8, 32], strides = [1, 1]} : vector<8x128xf32> to vector<8x32xf32>
    %89 = arith.mulf %87, %88 : vector<8x32xf32>
    %90 = arith.addf %86, %89 : vector<8x32xf32>
    %91 = vector.extract_strided_slice %83 {offsets = [0, 32], sizes = [8, 32], strides = [1, 1]} : vector<8x128xf32> to vector<8x32xf32>
    %92 = arith.mulf %91, %56 : vector<8x32xf32>
    %93 = vector.extract_strided_slice %83 {offsets = [0, 0], sizes = [8, 32], strides = [1, 1]} : vector<8x128xf32> to vector<8x32xf32>
    %94 = vector.extract_strided_slice %84 {offsets = [0, 64], sizes = [8, 32], strides = [1, 1]} : vector<8x128xf32> to vector<8x32xf32>
    %95 = arith.mulf %93, %94 : vector<8x32xf32>
    %96 = arith.addf %92, %95 : vector<8x32xf32>
    %97 = vector.extract_strided_slice %77 {offsets = [0, 96], sizes = [8, 32], strides = [1, 1]} : vector<8x128xf32> to vector<8x32xf32>
    %98 = math.tanh %90 : vector<8x32xf32>
    %99 = arith.mulf %97, %98 : vector<8x32xf32>
    %100 = vector.extract_strided_slice %83 {offsets = [0, 96], sizes = [8, 32], strides = [1, 1]} : vector<8x128xf32> to vector<8x32xf32>
    %101 = math.tanh %96 : vector<8x32xf32>
    %102 = arith.mulf %100, %101 : vector<8x32xf32>
    %103 = arith.addf %63, %99 : vector<8x32xf32>
    %104 = arith.addf %64, %102 : vector<8x32xf32>
    %105 = arith.maximumf %65, %99 : vector<8x32xf32>
    %106 = arith.maximumf %66, %102 : vector<8x32xf32>
    %107 = vector.extract_strided_slice %11 {offsets = [16, 0], sizes = [8, 128], strides = [1, 1]} : vector<32x128xf32> to vector<8x128xf32>
    %cst_43 = arith.constant dense<0.000000e+00> : vector<8x128xf32>
    %108 = tpu.matmul %99, %17, %cst_43 {dimension_numbers = #tpu.dot_dimension_numbers<[1], [0], [0], [1], [0, 0, 1, 1], [], []>} : vector<8x32xf32>, vector<32x128xf32>, vector<8x128xf32> -> vector<8x128xf32>
    %109 = arith.addf %107, %108 : vector<8x128xf32>
    %110 = vector.extract_strided_slice %16 {offsets = [8, 0], sizes = [8, 128], strides = [1, 1]} : vector<32x128xf32> to vector<8x128xf32>
    %cst_44 = arith.constant dense<0.000000e+00> : vector<8x128xf32>
    %111 = tpu.matmul %102, %18, %cst_44 {dimension_numbers = #tpu.dot_dimension_numbers<[1], [0], [0], [1], [0, 0, 1, 1], [], []>} : vector<8x32xf32>, vector<32x128xf32>, vector<8x128xf32> -> vector<8x128xf32>
    %112 = arith.addf %110, %111 : vector<8x128xf32>
    %113 = arith.negf %109 : vector<8x128xf32>
    %114 = math.exp %113 : vector<8x128xf32>
    %cst_45 = arith.constant 1.000000e+00 : f32
    %115 = vector.broadcast %cst_45 : f32 to vector<8x128xf32>
    %116 = arith.addf %115, %114 : vector<8x128xf32>
    %117 = arith.divf %115, %116 : vector<8x128xf32>
    %118 = math.tanh %109 : vector<8x128xf32>
    %119 = arith.negf %112 : vector<8x128xf32>
    %120 = math.exp %119 : vector<8x128xf32>
    %cst_46 = arith.constant 1.000000e+00 : f32
    %121 = vector.broadcast %cst_46 : f32 to vector<8x128xf32>
    %122 = arith.addf %121, %120 : vector<8x128xf32>
    %123 = arith.divf %121, %122 : vector<8x128xf32>
    %124 = math.tanh %112 : vector<8x128xf32>
    %125 = vector.extract_strided_slice %117 {offsets = [0, 32], sizes = [8, 32], strides = [1, 1]} : vector<8x128xf32> to vector<8x32xf32>
    %126 = arith.mulf %125, %90 : vector<8x32xf32>
    %127 = vector.extract_strided_slice %117 {offsets = [0, 0], sizes = [8, 32], strides = [1, 1]} : vector<8x128xf32> to vector<8x32xf32>
    %128 = vector.extract_strided_slice %118 {offsets = [0, 64], sizes = [8, 32], strides = [1, 1]} : vector<8x128xf32> to vector<8x32xf32>
    %129 = arith.mulf %127, %128 : vector<8x32xf32>
    %130 = arith.addf %126, %129 : vector<8x32xf32>
    %131 = vector.extract_strided_slice %123 {offsets = [0, 32], sizes = [8, 32], strides = [1, 1]} : vector<8x128xf32> to vector<8x32xf32>
    %132 = arith.mulf %131, %96 : vector<8x32xf32>
    %133 = vector.extract_strided_slice %123 {offsets = [0, 0], sizes = [8, 32], strides = [1, 1]} : vector<8x128xf32> to vector<8x32xf32>
    %134 = vector.extract_strided_slice %124 {offsets = [0, 64], sizes = [8, 32], strides = [1, 1]} : vector<8x128xf32> to vector<8x32xf32>
    %135 = arith.mulf %133, %134 : vector<8x32xf32>
    %136 = arith.addf %132, %135 : vector<8x32xf32>
    %137 = vector.extract_strided_slice %117 {offsets = [0, 96], sizes = [8, 32], strides = [1, 1]} : vector<8x128xf32> to vector<8x32xf32>
    %138 = math.tanh %130 : vector<8x32xf32>
    %139 = arith.mulf %137, %138 : vector<8x32xf32>
    %140 = vector.extract_strided_slice %123 {offsets = [0, 96], sizes = [8, 32], strides = [1, 1]} : vector<8x128xf32> to vector<8x32xf32>
    %141 = math.tanh %136 : vector<8x32xf32>
    %142 = arith.mulf %140, %141 : vector<8x32xf32>
    %143 = arith.addf %103, %139 : vector<8x32xf32>
    %144 = arith.addf %104, %142 : vector<8x32xf32>
    %145 = arith.maximumf %105, %139 : vector<8x32xf32>
    %146 = arith.maximumf %106, %142 : vector<8x32xf32>
    %147 = vector.extract_strided_slice %11 {offsets = [24, 0], sizes = [8, 128], strides = [1, 1]} : vector<32x128xf32> to vector<8x128xf32>
    %cst_47 = arith.constant dense<0.000000e+00> : vector<8x128xf32>
    %148 = tpu.matmul %139, %17, %cst_47 {dimension_numbers = #tpu.dot_dimension_numbers<[1], [0], [0], [1], [0, 0, 1, 1], [], []>} : vector<8x32xf32>, vector<32x128xf32>, vector<8x128xf32> -> vector<8x128xf32>
    %149 = arith.addf %147, %148 : vector<8x128xf32>
    %150 = vector.extract_strided_slice %16 {offsets = [0, 0], sizes = [8, 128], strides = [1, 1]} : vector<32x128xf32> to vector<8x128xf32>
    %cst_48 = arith.constant dense<0.000000e+00> : vector<8x128xf32>
    %151 = tpu.matmul %142, %18, %cst_48 {dimension_numbers = #tpu.dot_dimension_numbers<[1], [0], [0], [1], [0, 0, 1, 1], [], []>} : vector<8x32xf32>, vector<32x128xf32>, vector<8x128xf32> -> vector<8x128xf32>
    %152 = arith.addf %150, %151 : vector<8x128xf32>
    %153 = arith.negf %149 : vector<8x128xf32>
    %154 = math.exp %153 : vector<8x128xf32>
    %cst_49 = arith.constant 1.000000e+00 : f32
    %155 = vector.broadcast %cst_49 : f32 to vector<8x128xf32>
    %156 = arith.addf %155, %154 : vector<8x128xf32>
    %157 = arith.divf %155, %156 : vector<8x128xf32>
    %158 = math.tanh %149 : vector<8x128xf32>
    %159 = arith.negf %152 : vector<8x128xf32>
    %160 = math.exp %159 : vector<8x128xf32>
    %cst_50 = arith.constant 1.000000e+00 : f32
    %161 = vector.broadcast %cst_50 : f32 to vector<8x128xf32>
    %162 = arith.addf %161, %160 : vector<8x128xf32>
    %163 = arith.divf %161, %162 : vector<8x128xf32>
    %164 = math.tanh %152 : vector<8x128xf32>
    %165 = vector.extract_strided_slice %157 {offsets = [0, 32], sizes = [8, 32], strides = [1, 1]} : vector<8x128xf32> to vector<8x32xf32>
    %166 = arith.mulf %165, %130 : vector<8x32xf32>
    %167 = vector.extract_strided_slice %157 {offsets = [0, 0], sizes = [8, 32], strides = [1, 1]} : vector<8x128xf32> to vector<8x32xf32>
    %168 = vector.extract_strided_slice %158 {offsets = [0, 64], sizes = [8, 32], strides = [1, 1]} : vector<8x128xf32> to vector<8x32xf32>
    %169 = arith.mulf %167, %168 : vector<8x32xf32>
    %170 = arith.addf %166, %169 : vector<8x32xf32>
    %171 = vector.extract_strided_slice %163 {offsets = [0, 32], sizes = [8, 32], strides = [1, 1]} : vector<8x128xf32> to vector<8x32xf32>
    %172 = arith.mulf %171, %136 : vector<8x32xf32>
    %173 = vector.extract_strided_slice %163 {offsets = [0, 0], sizes = [8, 32], strides = [1, 1]} : vector<8x128xf32> to vector<8x32xf32>
    %174 = vector.extract_strided_slice %164 {offsets = [0, 64], sizes = [8, 32], strides = [1, 1]} : vector<8x128xf32> to vector<8x32xf32>
    %175 = arith.mulf %173, %174 : vector<8x32xf32>
    %176 = arith.addf %172, %175 : vector<8x32xf32>
    %177 = vector.extract_strided_slice %157 {offsets = [0, 96], sizes = [8, 32], strides = [1, 1]} : vector<8x128xf32> to vector<8x32xf32>
    %178 = math.tanh %170 : vector<8x32xf32>
    %179 = arith.mulf %177, %178 : vector<8x32xf32>
    %180 = vector.extract_strided_slice %163 {offsets = [0, 96], sizes = [8, 32], strides = [1, 1]} : vector<8x128xf32> to vector<8x32xf32>
    %181 = math.tanh %176 : vector<8x32xf32>
    %182 = arith.mulf %180, %181 : vector<8x32xf32>
    %183 = arith.addf %143, %179 : vector<8x32xf32>
    %184 = arith.addf %144, %182 : vector<8x32xf32>
    %185 = arith.maximumf %145, %179 : vector<8x32xf32>
    %186 = arith.maximumf %146, %182 : vector<8x32xf32>
    %c0_51 = arith.constant 0 : index
    %c0_52 = arith.constant 0 : index
    %187 = vector.load %arg13[%c0_51, %c0_52] : memref<8x32xf32, #tpu.memory_space<vmem>>, vector<8x32xf32>
    tpu.vector_store %arg13[%c0_51, %c0_52], %179 {strides = array<i32>} : memref<8x32xf32, #tpu.memory_space<vmem>>, vector<8x32xf32>,
    %c0_53 = arith.constant 0 : index
    %c0_54 = arith.constant 0 : index
    %188 = vector.load %arg14[%c0_53, %c0_54] : memref<8x32xf32, #tpu.memory_space<vmem>>, vector<8x32xf32>
    tpu.vector_store %arg14[%c0_53, %c0_54], %170 {strides = array<i32>} : memref<8x32xf32, #tpu.memory_space<vmem>>, vector<8x32xf32>,
    %c0_55 = arith.constant 0 : index
    %c0_56 = arith.constant 0 : index
    %189 = vector.load %arg15[%c0_55, %c0_56] : memref<8x32xf32, #tpu.memory_space<vmem>>, vector<8x32xf32>
    tpu.vector_store %arg15[%c0_55, %c0_56], %182 {strides = array<i32>} : memref<8x32xf32, #tpu.memory_space<vmem>>, vector<8x32xf32>,
    %c0_57 = arith.constant 0 : index
    %c0_58 = arith.constant 0 : index
    %190 = vector.load %arg16[%c0_57, %c0_58] : memref<8x32xf32, #tpu.memory_space<vmem>>, vector<8x32xf32>
    tpu.vector_store %arg16[%c0_57, %c0_58], %176 {strides = array<i32>} : memref<8x32xf32, #tpu.memory_space<vmem>>, vector<8x32xf32>,
    %c0_59 = arith.constant 0 : index
    %c0_60 = arith.constant 0 : index
    %191 = vector.load %arg17[%c0_59, %c0_60] : memref<8x32xf32, #tpu.memory_space<vmem>>, vector<8x32xf32>
    tpu.vector_store %arg17[%c0_59, %c0_60], %183 {strides = array<i32>} : memref<8x32xf32, #tpu.memory_space<vmem>>, vector<8x32xf32>,
    %c0_61 = arith.constant 0 : index
    %c0_62 = arith.constant 0 : index
    %192 = vector.load %arg18[%c0_61, %c0_62] : memref<8x32xf32, #tpu.memory_space<vmem>>, vector<8x32xf32>
    tpu.vector_store %arg18[%c0_61, %c0_62], %184 {strides = array<i32>} : memref<8x32xf32, #tpu.memory_space<vmem>>, vector<8x32xf32>,
    %c0_63 = arith.constant 0 : index
    %c0_64 = arith.constant 0 : index
    %193 = vector.load %arg19[%c0_63, %c0_64] : memref<8x32xf32, #tpu.memory_space<vmem>>, vector<8x32xf32>
    tpu.vector_store %arg19[%c0_63, %c0_64], %185 {strides = array<i32>} : memref<8x32xf32, #tpu.memory_space<vmem>>, vector<8x32xf32>,
    %c0_65 = arith.constant 0 : index
    %c0_66 = arith.constant 0 : index
    %194 = vector.load %arg20[%c0_65, %c0_66] : memref<8x32xf32, #tpu.memory_space<vmem>>, vector<8x32xf32>
    tpu.vector_store %arg20[%c0_65, %c0_66], %186 {strides = array<i32>} : memref<8x32xf32, #tpu.memory_space<vmem>>, vector<8x32xf32>,
    %c1_i32 = arith.constant 1 : i32
    %195 = arith.cmpi eq, %arg1, %c1_i32 : i32
    %196 = arith.extui %195 : i1 to i32
    %c0_i32_67 = arith.constant 0 : i32
    %197 = arith.cmpi ne, %196, %c0_i32_67 : i32
    scf.if %197 {
      %cst_68 = arith.constant 1.250000e-01 : f32
      %198 = vector.broadcast %cst_68 : f32 to vector<8x32xf32>
      %199 = arith.mulf %183, %198 : vector<8x32xf32>
      %cst_69 = arith.constant 1.250000e-01 : f32
      %200 = vector.broadcast %cst_69 : f32 to vector<8x32xf32>
      %201 = arith.mulf %184, %200 : vector<8x32xf32>
      %c0_70 = arith.constant 0 : index
      %c0_71 = arith.constant 0 : index
      %202 = vector.load %arg10[%c0_70, %c0_71] : memref<128x32xf32, #tpu.memory_space<vmem>>, vector<128x32xf32>
      %203 = vector.extract_strided_slice %202 {offsets = [0, 0], sizes = [32, 32], strides = [1, 1]} : vector<128x32xf32> to vector<32x32xf32>
      %cst_72 = arith.constant dense<0.000000e+00> : vector<8x32xf32>
      %204 = tpu.matmul %199, %203, %cst_72 {dimension_numbers = #tpu.dot_dimension_numbers<[1], [0], [0], [1], [0, 0, 1, 1], [], []>} : vector<8x32xf32>, vector<32x32xf32>, vector<8x32xf32> -> vector<8x32xf32>
      %205 = vector.extract_strided_slice %202 {offsets = [32, 0], sizes = [32, 32], strides = [1, 1]} : vector<128x32xf32> to vector<32x32xf32>
      %cst_73 = arith.constant dense<0.000000e+00> : vector<8x32xf32>
      %206 = tpu.matmul %201, %205, %cst_73 {dimension_numbers = #tpu.dot_dimension_numbers<[1], [0], [0], [1], [0, 0, 1, 1], [], []>} : vector<8x32xf32>, vector<32x32xf32>, vector<8x32xf32> -> vector<8x32xf32>
      %207 = arith.addf %204, %206 : vector<8x32xf32>
      %208 = vector.extract_strided_slice %202 {offsets = [64, 0], sizes = [32, 32], strides = [1, 1]} : vector<128x32xf32> to vector<32x32xf32>
      %cst_74 = arith.constant dense<0.000000e+00> : vector<8x32xf32>
      %209 = tpu.matmul %185, %208, %cst_74 {dimension_numbers = #tpu.dot_dimension_numbers<[1], [0], [0], [1], [0, 0, 1, 1], [], []>} : vector<8x32xf32>, vector<32x32xf32>, vector<8x32xf32> -> vector<8x32xf32>
      %210 = arith.addf %207, %209 : vector<8x32xf32>
      %211 = vector.extract_strided_slice %202 {offsets = [96, 0], sizes = [32, 32], strides = [1, 1]} : vector<128x32xf32> to vector<32x32xf32>
      %cst_75 = arith.constant dense<0.000000e+00> : vector<8x32xf32>
      %212 = tpu.matmul %186, %211, %cst_75 {dimension_numbers = #tpu.dot_dimension_numbers<[1], [0], [0], [1], [0, 0, 1, 1], [], []>} : vector<8x32xf32>, vector<32x32xf32>, vector<8x32xf32> -> vector<8x32xf32>
      %213 = arith.addf %210, %212 : vector<8x32xf32>
      %c0_76 = arith.constant 0 : index
      %c0_77 = arith.constant 0 : index
      %214 = vector.load %arg11[%c0_76, %c0_77] : memref<1x32xf32, #tpu.memory_space<vmem>>, vector<1x32xf32>
      %215 = vector.broadcast %214 : vector<1x32xf32> to vector<8x32xf32>
      %216 = arith.addf %213, %215 : vector<8x32xf32>
      %cst_78 = arith.constant 0.000000e+00 : f32
      %217 = vector.broadcast %cst_78 : f32 to vector<8x32xf32>
      %218 = arith.maximumf %216, %217 : vector<8x32xf32>
      %c0_79 = arith.constant 0 : index
      %c0_80 = arith.constant 0 : index
      %219 = vector.load %arg12[%c0_79, %c0_80] : memref<8x32xf32, #tpu.memory_space<vmem>>, vector<8x32xf32>
      tpu.vector_store %arg12[%c0_79, %c0_80], %218 {strides = array<i32>} : memref<8x32xf32, #tpu.memory_space<vmem>>, vector<8x32xf32>,
    } else {
    }
    return
  }
  func.func @transform_0(%arg0: i32, %arg1: i32) -> (i32, i32, i32) {
    %c0_i32 = arith.constant 0 : i32
    %c0_i32_0 = arith.constant 0 : i32
    return %arg1, %arg0, %c0_i32 : i32, i32, i32
  }
  func.func @transform_1(%arg0: i32, %arg1: i32) -> (i32, i32, i32) {
    %c1_i32 = arith.constant 1 : i32
    %0 = arith.subi %c1_i32, %arg1 : i32
    %c0_i32 = arith.constant 0 : i32
    %c0_i32_0 = arith.constant 0 : i32
    return %0, %arg0, %c0_i32 : i32, i32, i32
  }
  func.func @transform_2(%arg0: i32, %arg1: i32) -> (i32, i32) {
    %c0_i32 = arith.constant 0 : i32
    %c0_i32_0 = arith.constant 0 : i32
    %c0_i32_1 = arith.constant 0 : i32
    return %c0_i32, %c0_i32_0 : i32, i32
  }
  func.func @transform_3(%arg0: i32, %arg1: i32) -> (i32, i32) {
    %c0_i32 = arith.constant 0 : i32
    %c0_i32_0 = arith.constant 0 : i32
    %c0_i32_1 = arith.constant 0 : i32
    return %c0_i32, %c0_i32_0 : i32, i32
  }
  func.func @transform_4(%arg0: i32, %arg1: i32) -> (i32, i32) {
    %c0_i32 = arith.constant 0 : i32
    %c0_i32_0 = arith.constant 0 : i32
    %c0_i32_1 = arith.constant 0 : i32
    return %c0_i32, %c0_i32_0 : i32, i32
  }
  func.func @transform_5(%arg0: i32, %arg1: i32) -> (i32, i32) {
    %c0_i32 = arith.constant 0 : i32
    %c0_i32_0 = arith.constant 0 : i32
    %c0_i32_1 = arith.constant 0 : i32
    return %c0_i32, %c0_i32_0 : i32, i32
  }
  func.func @transform_6(%arg0: i32, %arg1: i32) -> (i32, i32) {
    %c0_i32 = arith.constant 0 : i32
    %c0_i32_0 = arith.constant 0 : i32
    %c0_i32_1 = arith.constant 0 : i32
    return %c0_i32, %c0_i32_0 : i32, i32
  }
  func.func @transform_7(%arg0: i32, %arg1: i32) -> (i32, i32) {
    %c0_i32 = arith.constant 0 : i32
    %c0_i32_0 = arith.constant 0 : i32
    %c0_i32_1 = arith.constant 0 : i32
    return %c0_i32, %c0_i32_0 : i32, i32
  }
  func.func @transform_8(%arg0: i32, %arg1: i32) -> (i32, i32) {
    %c0_i32 = arith.constant 0 : i32
    %c0_i32_0 = arith.constant 0 : i32
    %c0_i32_1 = arith.constant 0 : i32
    return %c0_i32, %c0_i32_0 : i32, i32
  }
  func.func @transform_9(%arg0: i32, %arg1: i32) -> (i32, i32) {
    %c0_i32 = arith.constant 0 : i32
    %c0_i32_0 = arith.constant 0 : i32
    %c0_i32_1 = arith.constant 0 : i32
    return %c0_i32, %c0_i32_0 : i32, i32
  }
  func.func @transform_10(%arg0: i32, %arg1: i32) -> (i32, i32) {
    %c0_i32 = arith.constant 0 : i32
    %c0_i32_0 = arith.constant 0 : i32
    return %arg0, %c0_i32 : i32, i32
  }
}

</mosaic_0001>

<llo_original>
// kernel: tpu_custom_call.1
$region0: #{tpu_custom_call.1}
  #allocation0 [shape = 'u32[]', space=smem, size = 0x4, offset = 0x4, fixed_abs, tag = 'smem constant byte address 0x4 - core index']
  #allocation1 [shape = 'u32[144,128]{1,0:T(1,128)}', space=vmem, size = 0x12000, scoped, tag = 'internal scratch']
  #allocation2 [shape = 'f32[8,32]{1,0:T(8,128)}', space=vmem, size = 0x1000, scoped, tag = 'scratch operand']
  #allocation3 [shape = 'f32[8,32]{1,0:T(8,128)}', space=vmem, size = 0x1000, scoped, tag = 'scratch operand']
  #allocation4 [shape = 'f32[8,32]{1,0:T(8,128)}', space=vmem, size = 0x1000, scoped, tag = 'scratch operand']
  #allocation5 [shape = 'f32[8,32]{1,0:T(8,128)}', space=vmem, size = 0x1000, scoped, tag = 'scratch operand']
  #allocation6 [shape = 'f32[8,32]{1,0:T(8,128)}', space=vmem, size = 0x1000, scoped, tag = 'scratch operand']
  #allocation7 [shape = 'f32[8,32]{1,0:T(8,128)}', space=vmem, size = 0x1000, scoped, tag = 'scratch operand']
  #allocation8 [shape = 'f32[8,32]{1,0:T(8,128)}', space=vmem, size = 0x1000, scoped, tag = 'scratch operand']
  #allocation9 [shape = 'f32[8,32]{1,0:T(8,128)}', space=vmem, size = 0x1000, scoped, tag = 'scratch operand']
  %s0 = inlined_call_operand.vmem [shape: f32[8,8,32], index: 0, kind: input, shape index: {}]
  %s1 = inlined_call_operand.vmem [shape: f32[8,8,32], index: 1, kind: input, shape index: {}]
  %s2 = inlined_call_operand.vmem [shape: f32[32,128], index: 2, kind: input, shape index: {}]
  %s3 = inlined_call_operand.hbm [shape: f32[32,128], index: 3, kind: input, shape index: {}]
  %s4 = inlined_call_operand.vmem [shape: f32[1,128], index: 4, kind: input, shape index: {}]
  %s5 = inlined_call_operand.hbm [shape: f32[32,128], index: 5, kind: input, shape index: {}]
  %s6 = inlined_call_operand.hbm [shape: f32[32,128], index: 6, kind: input, shape index: {}]
  %s7 = inlined_call_operand.vmem [shape: f32[1,128], index: 7, kind: input, shape index: {}]
  %s8 = inlined_call_operand.vmem [shape: f32[128,32], index: 8, kind: input, shape index: {}]
  %s9 = inlined_call_operand.vmem [shape: f32[1,32], index: 9, kind: input, shape index: {}]
  %s10 = inlined_call_operand.hbm [shape: f32[8,32], index: 10, kind: output, shape index: {}]
  %s11 = sld [smem:[#allocation0]]
  $region93: #{tpu_custom_call.1} parent=0
    _
  %s13 = ssub.s32 1, %s11
  %s14 = scalar_select 0, %s13, %s11
  $region1: #{tpu_custom_call.1} parent=0
    #allocation10 [shape = 'u8[16384]{0}', space=vmem, size = 0x4000, scoped, tag = 'input window, operand 3, single buffered']
    #allocation11 [shape = 's32[2]{0}', space=sflag, size = 0x8, scoped, tag = 'scoped memory for tpu_custom_call.1']
    #allocation12 [shape = 's32[2]{0}', space=sflag, size = 0x8, scoped, tag = 'scoped memory for tpu_custom_call.1']
    #allocation13 [shape = 'u8[16384]{0}', space=vmem, size = 0x4000, scoped, tag = 'input window, operand 5, single buffered']
    #allocation14 [shape = 's32[1]{0}', space=sflag, size = 0x4, scoped, tag = 'scoped memory for tpu_custom_call.1']
    #allocation15 [shape = 'u8[16384]{0}', space=vmem, size = 0x4000, scoped, tag = 'input window, operand 6, single buffered']
    #allocation16 [shape = 'u8[4096]{0}', space=vmem, size = 0x1000, scoped, tag = 'output window, operand 0, single buffered']
    %15 = vsyncpa [#allocation11], 0
    %16 = vsyncpa [#allocation14], 0
    %17 = vsyncpa [#allocation12], 0
    loop: start=0, step=1, limit=4
    $region2: #{tpu_custom_call.1} parent=1 // loop_pre_header
      _
    $region3: #{tpu_custom_call.1} parent=1 // loop_header
      %s19 = sphi 0, %s23
      %p20 = scmp.ge.s32.totalorder %s19, 4
      %s26 = sphi 0, %s38
      %s27 = sphi 0, %s34
      %s28 = sphi 0, %s26
      %s29 = sphi 0, %s27
      %s30 = sphi 0, %s28
      %s31 = sphi 0, %s29
      %s43 = sphi 0, %s45
      %s46 = sphi 0, %s43
      %s47 = sphi 0, %s46
      %s63 = sphi 0, %s47
      %s73 = sphi 0, %s75
      %s76 = sphi 0, %s73
      %s77 = sphi 0, %s76
      %s93 = sphi 0, %s77
      %s97 = sphi 0, %s97
      %s99 = sphi 0, %s97
      %s100 = sphi 0, %s99
      %s114 = sphi 0, %s100
      %s118 = sphi 0, %s118
      %s120 = sphi 0, %s118
      %s121 = sphi 0, %s120
      %s135 = sphi 0, %s121
      %s139 = sphi 0, %s139
      %s141 = sphi 0, %s139
      %s142 = sphi 0, %s141
      %s156 = sphi 0, %s142
      %s160 = sphi 0, %s160
      %s162 = sphi 0, %s160
      %s163 = sphi 0, %s162
      %s177 = sphi 0, %s163
      %s181 = sphi 0, %s181
      %s183 = sphi 0, %s181
      %s184 = sphi 0, %s183
      %s198 = sphi 0, %s184
      %s202 = sphi 0, %s202
      %s204 = sphi 0, %s202
      %s205 = sphi 0, %s204
      %s219 = sphi 0, %s205
      %s223 = sphi 0, %s223
      %s225 = sphi 0, %s223
      %s226 = sphi 0, %s225
      %s240 = sphi 0, %s226
      %s244 = sphi 0, %s244
      %s246 = sphi 0, %s244
      %s247 = sphi 0, %s246
      %s261 = sphi 0, %s247
      %s267 = sphi 0, %s269
      %s270 = sphi 0, %s267
      %s271 = sphi 0, %s270
      %s287 = sphi 0, %s271
    $region4: #{tpu_custom_call.1} parent=1 // loop_header_branch
      %22 = sbr.rel (%p20) target = $region8
    $region5: #{tpu_custom_call.1} parent=1 // loop_body
      %s24 = ssub.s32 %s19, 1
      %s25 = ssub.s32 %s19, 2
      %s32 = sadd.s32 1, %s27
      %p33 = scmp.ge.s32.totalorder %s32, 2
      %s34 = scalar_select %p33, 0, %s32
      %s35 = sadd.s32 1, %s26
      %s36 = scalar_select %p33, %s35, %s26
      %p37 = scmp.ge.s32.totalorder %s36, 1
      %s38 = scalar_select %p37, 0, %s36
      %s39 = ssub.s32 %s27, %s34
      %s40 = ssub.s32 %s26, %s38
      %s41 = sor.u32 %s39, %s40
      %p42 = scmp.eq.s32.totalorder %s41, 0
      %s44 = sadd.s32 %s43, 1
      %s45 = scalar_select %p42, %s43, %s44
      %p48 = pneg %p42
      %p49 = scmp.eq.s32.totalorder %s19, 1
      %p50 = por %p48, %p49
      %p51 = scmp.ne.s32.totalorder %s43, %s46
      %p52 = scmp.eq.s32.totalorder %s19, 0
      %p53 = por %p51, %p52
      %p54 = scmp.ne.s32.totalorder %s43, %s46
      %p55 = scmp.eq.s32.totalorder %s24, 1
      %p56 = por %p54, %p55
      %p57 = scmp.ne.s32.totalorder %s46, %s47
      %p58 = scmp.eq.s32.totalorder %s24, 0
      %p59 = por %p57, %p58
      %p60 = scmp.ne.s32.totalorder %s46, %s47
      %p61 = scmp.eq.s32.totalorder %s25, 1
      %p62 = por %p60, %p61
      %p64 = scmp.ne.s32.totalorder %s47, %s63
      %p65 = scmp.eq.s32.totalorder %s25, 0
      %p66 = por %p64, %p65
      %s67 = ssub.s32 1, %s27
      %s68 = ssub.s32 1, %s34
      %s69 = ssub.s32 %s67, %s68
      %s70 = ssub.s32 %s26, %s38
      %s71 = sor.u32 %s69, %s70
      %p72 = scmp.eq.s32.totalorder %s71, 0
      %s74 = sadd.s32 %s73, 1
      %s75 = scalar_select %p72, %s73, %s74
      %p78 = pneg %p72
      %p79 = scmp.eq.s32.totalorder %s19, 1
      %p80 = por %p78, %p79
      %p81 = scmp.ne.s32.totalorder %s73, %s76
      %p82 = scmp.eq.s32.totalorder %s19, 0
      %p83 = por %p81, %p82
      %p84 = scmp.ne.s32.totalorder %s73, %s76
      %p85 = scmp.eq.s32.totalorder %s24, 1
      %p86 = por %p84, %p85
      %p87 = scmp.ne.s32.totalorder %s76, %s77
      %p88 = scmp.eq.s32.totalorder %s24, 0
      %p89 = por %p87, %p88
      %p90 = scmp.ne.s32.totalorder %s76, %s77
      %p91 = scmp.eq.s32.totalorder %s25, 1
      %p92 = por %p90, %p91
      %p94 = scmp.ne.s32.totalorder %s77, %s93
      %p95 = scmp.eq.s32.totalorder %s25, 0
      %p96 = por %p94, %p95
      %s98 = sadd.s32 %s97, 1
      %p101 = scmp.eq.s32.totalorder %s19, 1
      %p102 = scmp.ne.s32.totalorder %s97, %s99
      %p103 = scmp.eq.s32.totalorder %s19, 0
      %p104 = por %p102, %p103
      %p105 = scmp.ne.s32.totalorder %s97, %s99
      %p106 = scmp.eq.s32.totalorder %s24, 1
      %p107 = por %p105, %p106
      %p108 = scmp.ne.s32.totalorder %s99, %s100
      %p109 = scmp.eq.s32.totalorder %s24, 0
      %p110 = por %p108, %p109
      %p111 = scmp.ne.s32.totalorder %s99, %s100
      %p112 = scmp.eq.s32.totalorder %s25, 1
      %p113 = por %p111, %p112
      %p115 = scmp.ne.s32.totalorder %s100, %s114
      %p116 = scmp.eq.s32.totalorder %s25, 0
      %p117 = por %p115, %p116
      %s119 = sadd.s32 %s118, 1
      %p122 = scmp.eq.s32.totalorder %s19, 1
      %p123 = scmp.ne.s32.totalorder %s118, %s120
      %p124 = scmp.eq.s32.totalorder %s19, 0
      %p125 = por %p123, %p124
      %p126 = scmp.ne.s32.totalorder %s118, %s120
      %p127 = scmp.eq.s32.totalorder %s24, 1
      %p128 = por %p126, %p127
      %p129 = scmp.ne.s32.totalorder %s120, %s121
      %p130 = scmp.eq.s32.totalorder %s24, 0
      %p131 = por %p129, %p130
      %p132 = scmp.ne.s32.totalorder %s120, %s121
      %p133 = scmp.eq.s32.totalorder %s25, 1
      %p134 = por %p132, %p133
      %p136 = scmp.ne.s32.totalorder %s121, %s135
      %p137 = scmp.eq.s32.totalorder %s25, 0
      %p138 = por %p136, %p137
      %s140 = sadd.s32 %s139, 1
      %p143 = scmp.eq.s32.totalorder %s19, 1
      %p144 = scmp.ne.s32.totalorder %s139, %s141
      %p145 = scmp.eq.s32.totalorder %s19, 0
      %p146 = por %p144, %p145
      %p147 = scmp.ne.s32.totalorder %s139, %s141
      %p148 = scmp.eq.s32.totalorder %s24, 1
      %p149 = por %p147, %p148
      %p150 = scmp.ne.s32.totalorder %s141, %s142
      %p151 = scmp.eq.s32.totalorder %s24, 0
      %p152 = por %p150, %p151
      %p153 = scmp.ne.s32.totalorder %s141, %s142
      %p154 = scmp.eq.s32.totalorder %s25, 1
      %p155 = por %p153, %p154
      %p157 = scmp.ne.s32.totalorder %s142, %s156
      %p158 = scmp.eq.s32.totalorder %s25, 0
      %p159 = por %p157, %p158
      %s161 = sadd.s32 %s160, 1
      %p164 = scmp.eq.s32.totalorder %s19, 1
      %p165 = scmp.ne.s32.totalorder %s160, %s162
      %p166 = scmp.eq.s32.totalorder %s19, 0
      %p167 = por %p165, %p166
      %p168 = scmp.ne.s32.totalorder %s160, %s162
      %p169 = scmp.eq.s32.totalorder %s24, 1
      %p170 = por %p168, %p169
      %p171 = scmp.ne.s32.totalorder %s162, %s163
      %p172 = scmp.eq.s32.totalorder %s24, 0
      %p173 = por %p171, %p172
      %p174 = scmp.ne.s32.totalorder %s162, %s163
      %p175 = scmp.eq.s32.totalorder %s25, 1
      %p176 = por %p174, %p175
      %p178 = scmp.ne.s32.totalorder %s163, %s177
      %p179 = scmp.eq.s32.totalorder %s25, 0
      %p180 = por %p178, %p179
      %s182 = sadd.s32 %s181, 1
      %p185 = scmp.eq.s32.totalorder %s19, 1
      %p186 = scmp.ne.s32.totalorder %s181, %s183
      %p187 = scmp.eq.s32.totalorder %s19, 0
      %p188 = por %p186, %p187
      %p189 = scmp.ne.s32.totalorder %s181, %s183
      %p190 = scmp.eq.s32.totalorder %s24, 1
      %p191 = por %p189, %p190
      %p192 = scmp.ne.s32.totalorder %s183, %s184
      %p193 = scmp.eq.s32.totalorder %s24, 0
      %p194 = por %p192, %p193
      %p195 = scmp.ne.s32.totalorder %s183, %s184
      %p196 = scmp.eq.s32.totalorder %s25, 1
      %p197 = por %p195, %p196
      %p199 = scmp.ne.s32.totalorder %s184, %s198
      %p200 = scmp.eq.s32.totalorder %s25, 0
      %p201 = por %p199, %p200
      %s203 = sadd.s32 %s202, 1
      %p206 = scmp.eq.s32.totalorder %s19, 1
      %p207 = scmp.ne.s32.totalorder %s202, %s204
      %p208 = scmp.eq.s32.totalorder %s19, 0
      %p209 = por %p207, %p208
      %p210 = scmp.ne.s32.totalorder %s202, %s204
      %p211 = scmp.eq.s32.totalorder %s24, 1
      %p212 = por %p210, %p211
      %p213 = scmp.ne.s32.totalorder %s204, %s205
      %p214 = scmp.eq.s32.totalorder %s24, 0
      %p215 = por %p213, %p214
      %p216 = scmp.ne.s32.totalorder %s204, %s205
      %p217 = scmp.eq.s32.totalorder %s25, 1
      %p218 = por %p216, %p217
      %p220 = scmp.ne.s32.totalorder %s205, %s219
      %p221 = scmp.eq.s32.totalorder %s25, 0
      %p222 = por %p220, %p221
      %s224 = sadd.s32 %s223, 1
      %p227 = scmp.eq.s32.totalorder %s19, 1
      %p228 = scmp.ne.s32.totalorder %s223, %s225
      %p229 = scmp.eq.s32.totalorder %s19, 0
      %p230 = por %p228, %p229
      %p231 = scmp.ne.s32.totalorder %s223, %s225
      %p232 = scmp.eq.s32.totalorder %s24, 1
      %p233 = por %p231, %p232
      %p234 = scmp.ne.s32.totalorder %s225, %s226
      %p235 = scmp.eq.s32.totalorder %s24, 0
      %p236 = por %p234, %p235
      %p237 = scmp.ne.s32.totalorder %s225, %s226
      %p238 = scmp.eq.s32.totalorder %s25, 1
      %p239 = por %p237, %p238
      %p241 = scmp.ne.s32.totalorder %s226, %s240
      %p242 = scmp.eq.s32.totalorder %s25, 0
      %p243 = por %p241, %p242
      %s245 = sadd.s32 %s244, 1
      %p248 = scmp.eq.s32.totalorder %s19, 1
      %p249 = scmp.ne.s32.totalorder %s244, %s246
      %p250 = scmp.eq.s32.totalorder %s19, 0
      %p251 = por %p249, %p250
      %p252 = scmp.ne.s32.totalorder %s244, %s246
      %p253 = scmp.eq.s32.totalorder %s24, 1
      %p254 = por %p252, %p253
      %p255 = scmp.ne.s32.totalorder %s246, %s247
      %p256 = scmp.eq.s32.totalorder %s24, 0
      %p257 = por %p255, %p256
      %p258 = scmp.ne.s32.totalorder %s246, %s247
      %p259 = scmp.eq.s32.totalorder %s25, 1
      %p260 = por %p258, %p259
      %p262 = scmp.ne.s32.totalorder %s247, %s261
      %p263 = scmp.eq.s32.totalorder %s25, 0
      %p264 = por %p262, %p263
      %s265 = ssub.s32 %s26, %s38
      %p266 = scmp.eq.s32.totalorder %s265, 0
      %s268 = sadd.s32 %s267, 1
      %s269 = scalar_select %p266, %s267, %s268
      %p272 = pneg %p266
      %p273 = scmp.eq.s32.totalorder %s19, 1
      %p274 = por %p272, %p273
      %p275 = scmp.ne.s32.totalorder %s267, %s270
      %p276 = scmp.eq.s32.totalorder %s19, 0
      %p277 = por %p275, %p276
      %p278 = scmp.ne.s32.totalorder %s267, %s270
      %p279 = scmp.eq.s32.totalorder %s24, 1
      %p280 = por %p278, %p279
      %p281 = scmp.ne.s32.totalorder %s270, %s271
      %p282 = scmp.eq.s32.totalorder %s24, 0
      %p283 = por %p281, %p282
      %p284 = scmp.ne.s32.totalorder %s270, %s271
      %p285 = scmp.eq.s32.totalorder %s25, 1
      %p286 = por %p284, %p285
      %p288 = scmp.ne.s32.totalorder %s271, %s287
      %p289 = scmp.eq.s32.totalorder %s25, 0
      %p290 = por %p288, %p289
      %p291 = scmp.le.s32.totalorder 1, %s19
      %p292 = scmp.lt.s32.totalorder %s19, 3
      %p293 = pnand %p291, %p292
      %p294 = pneg %p293
      // Predicated region
      $region9: #{tpu_custom_call.1} parent=5 // pred_check
        _
      $region10: #{tpu_custom_call.1} parent=5 // pred_check_branch
        %296 = sbr.rel (%p293) target = $region12
      $region11: #{tpu_custom_call.1} parent=5 // pred_region
        %s297 = ssub.s32 %s19, 1
        // Predicated region
        $region13: #{tpu_custom_call.1} parent=11 // pred_check
          %p298 = pneg %p110
        $region14: #{tpu_custom_call.1} parent=11 // pred_check_branch
          %300 = sbr.rel (%p298) target = $region16
        $region15: #{tpu_custom_call.1} parent=11 // pred_region
          _
        $region16: #{tpu_custom_call.1} parent=11 // pred_fallthru
          _
        // Predicated region
        $region17: #{tpu_custom_call.1} parent=11 // pred_check
          %p301 = pneg %p131
        $region18: #{tpu_custom_call.1} parent=11 // pred_check_branch
          %303 = sbr.rel (%p301) target = $region20
        $region19: #{tpu_custom_call.1} parent=11 // pred_region
          %s305 = ssub.s32 512, 512
          %306 = vsyncadd [#allocation11], %s305
          %s307 = sshll.u32 [#allocation10], 4
          %s308 = int_to_ptr.vmem [resolvable:$true] %s307
          %313 = dma.hbm_to_vmem [thread:$0]  %s3, 512, %s308, [#allocation11], 128, 128, 8
        $region20: #{tpu_custom_call.1} parent=11 // pred_fallthru
          _
        // Predicated region
        $region21: #{tpu_custom_call.1} parent=11 // pred_check
          %p314 = pneg %p152
        $region22: #{tpu_custom_call.1} parent=11 // pred_check_branch
          %316 = sbr.rel (%p314) target = $region24
        $region23: #{tpu_custom_call.1} parent=11 // pred_region
          _
        $region24: #{tpu_custom_call.1} parent=11 // pred_fallthru
          _
        // Predicated region
        $region25: #{tpu_custom_call.1} parent=11 // pred_check
          %p317 = pneg %p173
        $region26: #{tpu_custom_call.1} parent=11 // pred_check_branch
          %319 = sbr.rel (%p317) target = $region28
        $region27: #{tpu_custom_call.1} parent=11 // pred_region
          %s321 = ssub.s32 512, 512
          %322 = vsyncadd [#allocation14], %s321
          %s323 = sshll.u32 [#allocation13], 4
          %s324 = int_to_ptr.vmem [resolvable:$true] %s323
          %329 = dma.hbm_to_vmem [thread:$0]  %s5, 512, %s324, [#allocation14], 128, 128, 8
        $region28: #{tpu_custom_call.1} parent=11 // pred_fallthru
          _
        // Predicated region
        $region29: #{tpu_custom_call.1} parent=11 // pred_check
          %p330 = pneg %p194
        $region30: #{tpu_custom_call.1} parent=11 // pred_check_branch
          %332 = sbr.rel (%p330) target = $region32
        $region31: #{tpu_custom_call.1} parent=11 // pred_region
          %s334 = ssub.s32 512, 512
          %335 = vsyncadd [#allocation14], %s334
          %s336 = sshll.u32 [#allocation15], 4
          %s337 = int_to_ptr.vmem [resolvable:$true] %s336
          %342 = dma.hbm_to_vmem [thread:$0]  %s6, 512, %s337, [#allocation14], 128, 128, 8
        $region32: #{tpu_custom_call.1} parent=11 // pred_fallthru
          _
        // Predicated region
        $region33: #{tpu_custom_call.1} parent=11 // pred_check
          %p343 = pneg %p215
        $region34: #{tpu_custom_call.1} parent=11 // pred_check_branch
          %345 = sbr.rel (%p343) target = $region36
        $region35: #{tpu_custom_call.1} parent=11 // pred_region
          _
        $region36: #{tpu_custom_call.1} parent=11 // pred_fallthru
          _
        // Predicated region
        $region37: #{tpu_custom_call.1} parent=11 // pred_check
          %p346 = pneg %p236
        $region38: #{tpu_custom_call.1} parent=11 // pred_check_branch
          %348 = sbr.rel (%p346) target = $region40
        $region39: #{tpu_custom_call.1} parent=11 // pred_region
          _
        $region40: #{tpu_custom_call.1} parent=11 // pred_fallthru
          _
        // Predicated region
        $region41: #{tpu_custom_call.1} parent=11 // pred_check
          %p349 = pneg %p257
        $region42: #{tpu_custom_call.1} parent=11 // pred_check_branch
          %351 = sbr.rel (%p349) target = $region44
        $region43: #{tpu_custom_call.1} parent=11 // pred_region
          _
        $region44: #{tpu_custom_call.1} parent=11 // pred_fallthru
          _
      $region12: #{tpu_custom_call.1} parent=5 // pred_fallthru
        _
      %p352 = scmp.lt.s32.totalorder %s19, 2
      // Predicated region
      $region45: #{tpu_custom_call.1} parent=5 // pred_check
        %p353 = pneg %p352
      $region46: #{tpu_custom_call.1} parent=5 // pred_check_branch
        %355 = sbr.rel (%p353) target = $region48
      $region47: #{tpu_custom_call.1} parent=5 // pred_region
        // Predicated region
        $region49: #{tpu_custom_call.1} parent=47 // pred_check
          %p356 = pneg %p53
        $region50: #{tpu_custom_call.1} parent=47 // pred_check_branch
          %358 = sbr.rel (%p356) target = $region52
        $region51: #{tpu_custom_call.1} parent=47 // pred_region
          %s359 = smul.u32 4, %s27
          %p360 = scmp.lt.s32.totalorder %s359, 7
          %s361 = scalar_select %p360, %s359, 7
          %p362 = scmp.lt.s32.totalorder %s26, 0
          %s363 = scalar_select %p362, %s26, 0
          %s364 = sadd.s32 %s363, %s361
          %s365 = smul.addr %s364, 8
          %s366 = scalar_lea.vmem %s0, %s365
          %s367 = smul.u32 4, %s27
        $region52: #{tpu_custom_call.1} parent=47 // pred_fallthru
          _
        // Predicated region
        $region53: #{tpu_custom_call.1} parent=47 // pred_check
          %p368 = pneg %p83
        $region54: #{tpu_custom_call.1} parent=47 // pred_check_branch
          %370 = sbr.rel (%p368) target = $region56
        $region55: #{tpu_custom_call.1} parent=47 // pred_region
          %s371 = ssub.s32 1, %s27
          %s372 = smul.u32 4, %s371
          %p373 = scmp.lt.s32.totalorder %s372, 7
          %s374 = scalar_select %p373, %s372, 7
          %p375 = scmp.lt.s32.totalorder %s26, 0
          %s376 = scalar_select %p375, %s26, 0
          %s377 = sadd.s32 %s376, %s374
          %s378 = smul.addr %s377, 8
          %s379 = scalar_lea.vmem %s1, %s378
          %s380 = ssub.s32 1, %s27
          %s381 = smul.u32 4, %s380
        $region56: #{tpu_custom_call.1} parent=47 // pred_fallthru
          _
      $region48: #{tpu_custom_call.1} parent=5 // pred_fallthru
        _
      %p382 = scmp.le.s32.totalorder 1, %s19
      %p383 = scmp.lt.s32.totalorder %s19, 3
      %p384 = pnand %p382, %p383
      %p385 = pneg %p384
      // Predicated region
      $region57: #{tpu_custom_call.1} parent=5 // pred_check
        _
      $region58: #{tpu_custom_call.1} parent=5 // pred_check_branch
        %387 = sbr.rel (%p384) target = $region60
      $region59: #{tpu_custom_call.1} parent=5 // pred_region
        %s388 = ssub.s32 %s19, 1
        // Predicated region
        $region61: #{tpu_custom_call.1} parent=59 // pred_check
          %p389 = pneg %p131
        $region62: #{tpu_custom_call.1} parent=59 // pred_check_branch
          %391 = sbr.rel (%p389) target = $region64
        $region63: #{tpu_custom_call.1} parent=59 // pred_region
          %392 = dma.done [#allocation11], 512
        $region64: #{tpu_custom_call.1} parent=59 // pred_fallthru
          _
        // Predicated region
        $region65: #{tpu_custom_call.1} parent=59 // pred_check
          %p393 = pneg %p173
        $region66: #{tpu_custom_call.1} parent=59 // pred_check_branch
          %395 = sbr.rel (%p393) target = $region68
        $region67: #{tpu_custom_call.1} parent=59 // pred_region
          %396 = dma.done [#allocation14], 512
        $region68: #{tpu_custom_call.1} parent=59 // pred_fallthru
          _
        // Predicated region
        $region69: #{tpu_custom_call.1} parent=59 // pred_check
          %p397 = pneg %p194
        $region70: #{tpu_custom_call.1} parent=59 // pred_check_branch
          %399 = sbr.rel (%p397) target = $region72
        $region71: #{tpu_custom_call.1} parent=59 // pred_region
          %400 = dma.done [#allocation14], 512
        $region72: #{tpu_custom_call.1} parent=59 // pred_fallthru
          _
        %s401 = smul.u32 4, %s29
        %p402 = scmp.lt.s32.totalorder %s401, 7
        %s403 = scalar_select %p402, %s401, 7
        %p404 = scmp.lt.s32.totalorder %s28, 0
        %s405 = scalar_select %p404, %s28, 0
        %s406 = sadd.s32 %s405, %s403
        %s407 = smul.addr %s406, 8
        %s408 = scalar_lea.vmem %s0, %s407
        %p409 = pneg %p59
        %p410 = pneg %p56
        %s411 = ssub.s32 1, %s29
        %s412 = smul.u32 4, %s411
        %p413 = scmp.lt.s32.totalorder %s412, 7
        %s414 = scalar_select %p413, %s412, 7
        %p415 = scmp.lt.s32.totalorder %s28, 0
        %s416 = scalar_select %p415, %s28, 0
        %s417 = sadd.s32 %s416, %s414
        %s418 = smul.addr %s417, 8
        %s419 = scalar_lea.vmem %s1, %s418
        %p420 = pneg %p89
        %p421 = pneg %p86
        %p422 = pneg %p110
        %p423 = pneg %p107
        %p424 = pneg %p131
        %p425 = pneg %p128
        %p426 = pneg %p152
        %p427 = pneg %p149
        %p428 = pneg %p173
        %p429 = pneg %p170
        %p430 = pneg %p194
        %p431 = pneg %p191
        %p432 = pneg %p215
        %p433 = pneg %p212
        %p434 = pneg %p236
        %p435 = pneg %p233
        %p436 = pneg %p257
        %p437 = pneg %p254
        %p438 = pneg %p283
        %p439 = pneg %p280
        %s440 = smul.u32 4, %s29
        %p441 = scmp.lt.s32.totalorder %s440, 7
        %s442 = scalar_select %p441, %s440, 7
        %p443 = scmp.lt.s32.totalorder %s28, 0
        %s444 = scalar_select %p443, %s28, 0
        %s445 = sadd.s32 %s444, %s442
        %s446 = smul.addr %s445, 8
        %s447 = scalar_lea.vmem %s0, %s446
        %s448 = smul.u32 4, %s29
        %s449 = ssub.s32 1, %s29
        %s450 = smul.u32 4, %s449
        %p451 = scmp.lt.s32.totalorder %s450, 7
        %s452 = scalar_select %p451, %s450, 7
        %p453 = scmp.lt.s32.totalorder %s28, 0
        %s454 = scalar_select %p453, %s28, 0
        %s455 = sadd.s32 %s454, %s452
        %s456 = smul.addr %s455, 8
        %s457 = scalar_lea.vmem %s1, %s456
        %s458 = ssub.s32 1, %s29
        %s459 = smul.u32 4, %s458
        %p460 = scmp.eq.s32.totalorder %s29, 0
        // Predicated region
        $region73: #{tpu_custom_call.1} parent=59 // pred_check
          %p461 = pneg %p460
        $region74: #{tpu_custom_call.1} parent=59 // pred_check_branch
          %463 = sbr.rel (%p461) target = $region76
        $region75: #{tpu_custom_call.1} parent=59 // pred_region
          %vm464 = vcmask 261120
          %465 = vst.msk [vmem:[#allocation2] sm:$0xff] %vm464, 0.0
          %466 = vst.msk [vmem:[#allocation3] sm:$0xff] %vm464, 0.0
          %467 = vst.msk [vmem:[#allocation4] sm:$0xff] %vm464, 0.0
          %468 = vst.msk [vmem:[#allocation5] sm:$0xff] %vm464, 0.0
          %469 = vst.msk [vmem:[#allocation6] sm:$0xff] %vm464, 0.0
          %470 = vst.msk [vmem:[#allocation7] sm:$0xff] %vm464, 0.0
          %471 = vst.msk [vmem:[#allocation8] sm:$0xff] %vm464, -inf
          %472 = vst.msk [vmem:[#allocation9] sm:$0xff] %vm464, -inf
        $region76: #{tpu_custom_call.1} parent=59 // pred_fallthru
          _
        %v473 = vld [vmem:[%s447] sm:$0xff]
        %v474 = vld [vmem:[%s447 + $0x8] sm:$0xff]
        %v475 = vld [vmem:[%s447 + $0x10] sm:$0xff]
        %v476 = vld [vmem:[%s447 + $0x18] sm:$0xff]
        %v477 = vld [vmem:[%s457] sm:$0xff]
        %v478 = vld [vmem:[%s457 + $0x8] sm:$0xff]
        %v479 = vld [vmem:[%s457 + $0x10] sm:$0xff]
        %v480 = vld [vmem:[%s457 + $0x18] sm:$0xff]
        %v481 = vld [vmem:[%s2] sm:$0xff]
        %v482 = vld [vmem:[%s2 + $0x8] sm:$0xff]
        %v483 = vld [vmem:[%s2 + $0x10] sm:$0xff]
        %v484 = vld [vmem:[%s2 + $0x18] sm:$0xff]
        %v485 = vld [vmem:[%s4] sm:$0x1]
        %v487 = vlaneseq
        %v488 = vshrl.u32 %v487, 7
        %v489 = vsub.s32 0, %v488
        %v490 = vrot.slane %v485, %v489
        %vm492 = vcmask 261120
        %v494 = vsel %vm492, %v473, 0
        %v497 = vsel %vm492, %v474, 0
        %v500 = vsel %vm492, %v475, 0
        %v503 = vsel %vm492, %v476, 0
        %505 = vmatprep.subr.mxu0 0.0
        %506 = vmatpush1.msra.mxu0 0.0
        %507 = vmatprep.subr.mxu0 0.0
        %508 = vmatpush1.msra.mxu0 0.0
        %509 = vmatprep.subr.mxu0 0.0
        %510 = vmatpush1.msra.mxu0 0.0
        %511 = vmatprep.subr.mxu0 0.0
        %512 = vmatpush1.msra.mxu0 0.0
        %513 = vmatprep.subr.mxu0 0.0
        %514 = vmatpush1.msra.mxu0 0.0
        %515 = vmatprep.subr.mxu0 0.0
        %516 = vmatpush1.msra.mxu0 0.0
        %517 = vmatprep.subr.mxu0 0.0
        %518 = vmatpush1.msra.mxu0 0.0
        %519 = vmatprep.subr.mxu0 0.0
        %520 = vmatpush1.msra.mxu0 0.0
        %521 = vmatprep.subr.mxu0 0.0
        %522 = vmatpush1.msra.mxu0 0.0
        %523 = vmatprep.subr.mxu0 0.0
        %524 = vmatpush1.msra.mxu0 0.0
        %525 = vmatprep.subr.mxu0 0.0
        %526 = vmatpush1.msra.mxu0 0.0
        %527 = vmatprep.subr.mxu0 0.0
        %528 = vmatpush1.msra.mxu0 0.0
        %529 = vmatprep.subr.mxu0 0.0
        %530 = vmatpush1.msra.mxu0 %v484
        %531 = vmatprep.subr.mxu0 0.0
        %532 = vmatpush1.msra.mxu0 %v483
        %533 = vmatprep.subr.mxu0 0.0
        %534 = vmatpush1.msra.mxu0 %v482
        %535 = vmatprep.subr.mxu0 0.0
        %536 = vmatpush1.msra.mxu0 %v481
        %537 = vmatprep.subr.mxu0 0.0
        %538 = vmatpush2.msra.mxu0 0.0
        %539 = vmatprep.subr.mxu0 0.0
        %540 = vmatpush2.msra.mxu0 0.0
        %541 = vmatprep.subr.mxu0 0.0
        %542 = vmatpush2.msra.mxu0 0.0
        %543 = vmatprep.subr.mxu0 0.0
        %544 = vmatpush2.msra.mxu0 0.0
        %545 = vmatprep.subr.mxu0 0.0
        %546 = vmatpush2.msra.mxu0 0.0
        %547 = vmatprep.subr.mxu0 0.0
        %548 = vmatpush2.msra.mxu0 0.0
        %549 = vmatprep.subr.mxu0 0.0
        %550 = vmatpush2.msra.mxu0 0.0
        %551 = vmatprep.subr.mxu0 0.0
        %552 = vmatpush2.msra.mxu0 0.0
        %553 = vmatprep.subr.mxu0 0.0
        %554 = vmatpush2.msra.mxu0 0.0
        %555 = vmatprep.subr.mxu0 0.0
        %556 = vmatpush2.msra.mxu0 0.0
        %557 = vmatprep.subr.mxu0 0.0
        %558 = vmatpush2.msra.mxu0 0.0
        %559 = vmatprep.subr.mxu0 0.0
        %560 = vmatpush2.msra.mxu0 0.0
        %561 = vmatprep.subr.mxu0 0.0
        %562 = vmatpush2.msra.mxu0 0.0
        %563 = vmatprep.subr.mxu0 0.0
        %564 = vmatpush2.msra.mxu0 0.0
        %565 = vmatprep.subr.mxu0 0.0
        %566 = vmatpush2.msra.mxu0 0.0
        %567 = vmatprep.subr.mxu0 0.0
        %568 = vmatpush2.msra.mxu0 0.0
        %569 = vmatprep.mubr.f32.mxu0 0.0
        %570 = vmatmul.mubr.f32.gmra.mxu0 %v494
        %v571 = vpop.f32.mrf.mxu0
        %v572 = vadd.f32 %v490, %v571
        %v573 = vpop.f32.mrf.mxu0
        %574 = vmatprep.mubr.f32.mxu0 0.0
        %575 = vmatmul.mubr.f32.gmra.mxu0 %v497
        %v576 = vpop.f32.mrf.mxu0
        %v577 = vadd.f32 %v490, %v576
        %v578 = vpop.f32.mrf.mxu0
        %579 = vmatprep.mubr.f32.mxu0 0.0
        %580 = vmatmul.mubr.f32.gmra.mxu0 %v500
        %v581 = vpop.f32.mrf.mxu0
        %v582 = vadd.f32 %v490, %v581
        %v583 = vpop.f32.mrf.mxu0
        %584 = vmatprep.mubr.f32.mxu0 0.0
        %585 = vmatmul.mubr.f32.gmra.mxu0 %v503
        %v586 = vpop.f32.mrf.mxu0
        %v587 = vadd.f32 %v490, %v586
        %v588 = vpop.f32.mrf.mxu0
        %589 = vdwg.mxu0
        %v590 = vld [vmem:[#allocation13] sm:$0xff]
        %v591 = vld [vmem:[#allocation13 + $0x8] sm:$0xff]
        %v592 = vld [vmem:[#allocation13 + $0x10] sm:$0xff]
        %v593 = vld [vmem:[#allocation13 + $0x18] sm:$0xff]
        %v594 = vld [vmem:[%s7] sm:$0x1]
        %v596 = vlaneseq
        %v597 = vshrl.u32 %v596, 7
        %v598 = vsub.s32 0, %v597
        %v599 = vrot.slane %v594, %v598
        %v602 = vsel %vm492, %v477, 0
        %v605 = vsel %vm492, %v478, 0
        %v608 = vsel %vm492, %v479, 0
        %v611 = vsel %vm492, %v480, 0
        %613 = vmatprep.subr.mxu0 0.0
        %614 = vmatpush1.msra.mxu0 0.0
        %615 = vmatprep.subr.mxu0 0.0
        %616 = vmatpush1.msra.mxu0 0.0
        %617 = vmatprep.subr.mxu0 0.0
        %618 = vmatpush1.msra.mxu0 0.0
        %619 = vmatprep.subr.mxu0 0.0
        %620 = vmatpush1.msra.mxu0 0.0
        %621 = vmatprep.subr.mxu0 0.0
        %622 = vmatpush1.msra.mxu0 0.0
        %623 = vmatprep.subr.mxu0 0.0
        %624 = vmatpush1.msra.mxu0 0.0
        %625 = vmatprep.subr.mxu0 0.0
        %626 = vmatpush1.msra.mxu0 0.0
        %627 = vmatprep.subr.mxu0 0.0
        %628 = vmatpush1.msra.mxu0 0.0
        %629 = vmatprep.subr.mxu0 0.0
        %630 = vmatpush1.msra.mxu0 0.0
        %631 = vmatprep.subr.mxu0 0.0
        %632 = vmatpush1.msra.mxu0 0.0
        %633 = vmatprep.subr.mxu0 0.0
        %634 = vmatpush1.msra.mxu0 0.0
        %635 = vmatprep.subr.mxu0 0.0
        %636 = vmatpush1.msra.mxu0 0.0
        %637 = vmatprep.subr.mxu0 0.0
        %638 = vmatpush1.msra.mxu0 %v593
        %639 = vmatprep.subr.mxu0 0.0
        %640 = vmatpush1.msra.mxu0 %v592
        %641 = vmatprep.subr.mxu0 0.0
        %642 = vmatpush1.msra.mxu0 %v591
        %643 = vmatprep.subr.mxu0 0.0
        %644 = vmatpush1.msra.mxu0 %v590
        %645 = vmatprep.subr.mxu0 0.0
        %646 = vmatpush2.msra.mxu0 0.0
        %647 = vmatprep.subr.mxu0 0.0
        %648 = vmatpush2.msra.mxu0 0.0
        %649 = vmatprep.subr.mxu0 0.0
        %650 = vmatpush2.msra.mxu0 0.0
        %651 = vmatprep.subr.mxu0 0.0
        %652 = vmatpush2.msra.mxu0 0.0
        %653 = vmatprep.subr.mxu0 0.0
        %654 = vmatpush2.msra.mxu0 0.0
        %655 = vmatprep.subr.mxu0 0.0
        %656 = vmatpush2.msra.mxu0 0.0
        %657 = vmatprep.subr.mxu0 0.0
        %658 = vmatpush2.msra.mxu0 0.0
        %659 = vmatprep.subr.mxu0 0.0
        %660 = vmatpush2.msra.mxu0 0.0
        %661 = vmatprep.subr.mxu0 0.0
        %662 = vmatpush2.msra.mxu0 0.0
        %663 = vmatprep.subr.mxu0 0.0
        %664 = vmatpush2.msra.mxu0 0.0
        %665 = vmatprep.subr.mxu0 0.0
        %666 = vmatpush2.msra.mxu0 0.0
        %667 = vmatprep.subr.mxu0 0.0
        %668 = vmatpush2.msra.mxu0 0.0
        %669 = vmatprep.subr.mxu0 0.0
        %670 = vmatpush2.msra.mxu0 0.0
        %671 = vmatprep.subr.mxu0 0.0
        %672 = vmatpush2.msra.mxu0 0.0
        %673 = vmatprep.subr.mxu0 0.0
        %674 = vmatpush2.msra.mxu0 0.0
        %675 = vmatprep.subr.mxu0 0.0
        %676 = vmatpush2.msra.mxu0 0.0
        %677 = vmatprep.mubr.f32.mxu0 0.0
        %678 = vmatmul.mubr.f32.gmra.mxu0 %v602
        %v679 = vpop.f32.mrf.mxu0
        %v680 = vadd.f32 %v599, %v679
        %v681 = vpop.f32.mrf.mxu0
        %682 = vmatprep.mubr.f32.mxu0 0.0
        %683 = vmatmul.mubr.f32.gmra.mxu0 %v605
        %v684 = vpop.f32.mrf.mxu0
        %v685 = vadd.f32 %v599, %v684
        %v686 = vpop.f32.mrf.mxu0
        %687 = vmatprep.mubr.f32.mxu0 0.0
        %688 = vmatmul.mubr.f32.gmra.mxu0 %v608
        %v689 = vpop.f32.mrf.mxu0
        %v690 = vadd.f32 %v599, %v689
        %v691 = vpop.f32.mrf.mxu0
        %692 = vmatprep.mubr.f32.mxu0 0.0
        %693 = vmatmul.mubr.f32.gmra.mxu0 %v611
        %v694 = vpop.f32.mrf.mxu0
        %v695 = vadd.f32 %v599, %v694
        %v696 = vpop.f32.mrf.mxu0
        %697 = vdwg.mxu0
        %v698 = vld [vmem:[#allocation10] sm:$0xff]
        %v699 = vld [vmem:[#allocation10 + $0x8] sm:$0xff]
        %v700 = vld [vmem:[#allocation10 + $0x10] sm:$0xff]
        %v701 = vld [vmem:[#allocation10 + $0x18] sm:$0xff]
        %v702 = vld [vmem:[#allocation15] sm:$0xff]
        %v703 = vld [vmem:[#allocation15 + $0x8] sm:$0xff]
        %v704 = vld [vmem:[#allocation15 + $0x10] sm:$0xff]
        %v705 = vld [vmem:[#allocation15 + $0x18] sm:$0xff]
        %v706 = vld [vmem:[#allocation2] sm:$0xff]
        %v707 = vld [vmem:[#allocation3] sm:$0xff]
        %v708 = vld [vmem:[#allocation4] sm:$0xff]
        %v709 = vld [vmem:[#allocation5] sm:$0xff]
        %v710 = vld [vmem:[#allocation6] sm:$0xff]
        %v711 = vld [vmem:[#allocation7] sm:$0xff]
        %v712 = vld [vmem:[#allocation8] sm:$0xff]
        %v713 = vld [vmem:[#allocation9] sm:$0xff]
        %v715 = vsel %vm492, %v706, 0
        %717 = vmatprep.subr.mxu0 0.0
        %718 = vmatpush1.msra.mxu0 0.0
        %719 = vmatprep.subr.mxu0 0.0
        %720 = vmatpush1.msra.mxu0 0.0
        %721 = vmatprep.subr.mxu0 0.0
        %722 = vmatpush1.msra.mxu0 0.0
        %723 = vmatprep.subr.mxu0 0.0
        %724 = vmatpush1.msra.mxu0 0.0
        %725 = vmatprep.subr.mxu0 0.0
        %726 = vmatpush1.msra.mxu0 0.0
        %727 = vmatprep.subr.mxu0 0.0
        %728 = vmatpush1.msra.mxu0 0.0
        %729 = vmatprep.subr.mxu0 0.0
        %730 = vmatpush1.msra.mxu0 0.0
        %731 = vmatprep.subr.mxu0 0.0
        %732 = vmatpush1.msra.mxu0 0.0
        %733 = vmatprep.subr.mxu0 0.0
        %734 = vmatpush1.msra.mxu0 0.0
        %735 = vmatprep.subr.mxu0 0.0
        %736 = vmatpush1.msra.mxu0 0.0
        %737 = vmatprep.subr.mxu0 0.0
        %738 = vmatpush1.msra.mxu0 0.0
        %739 = vmatprep.subr.mxu0 0.0
        %740 = vmatpush1.msra.mxu0 0.0
        %741 = vmatprep.subr.mxu0 0.0
        %742 = vmatpush1.msra.mxu0 %v701
        %743 = vmatprep.subr.mxu0 0.0
        %744 = vmatpush1.msra.mxu0 %v700
        %745 = vmatprep.subr.mxu0 0.0
        %746 = vmatpush1.msra.mxu0 %v699
        %747 = vmatprep.subr.mxu0 0.0
        %748 = vmatpush1.msra.mxu0 %v698
        %749 = vmatprep.subr.mxu0 0.0
        %750 = vmatpush2.msra.mxu0 0.0
        %751 = vmatprep.subr.mxu0 0.0
        %752 = vmatpush2.msra.mxu0 0.0
        %753 = vmatprep.subr.mxu0 0.0
        %754 = vmatpush2.msra.mxu0 0.0
        %755 = vmatprep.subr.mxu0 0.0
        %756 = vmatpush2.msra.mxu0 0.0
        %757 = vmatprep.subr.mxu0 0.0
        %758 = vmatpush2.msra.mxu0 0.0
        %759 = vmatprep.subr.mxu0 0.0
        %760 = vmatpush2.msra.mxu0 0.0
        %761 = vmatprep.subr.mxu0 0.0
        %762 = vmatpush2.msra.mxu0 0.0
        %763 = vmatprep.subr.mxu0 0.0
        %764 = vmatpush2.msra.mxu0 0.0
        %765 = vmatprep.subr.mxu0 0.0
        %766 = vmatpush2.msra.mxu0 0.0
        %767 = vmatprep.subr.mxu0 0.0
        %768 = vmatpush2.msra.mxu0 0.0
        %769 = vmatprep.subr.mxu0 0.0
        %770 = vmatpush2.msra.mxu0 0.0
        %771 = vmatprep.subr.mxu0 0.0
        %772 = vmatpush2.msra.mxu0 0.0
        %773 = vmatprep.subr.mxu0 0.0
        %774 = vmatpush2.msra.mxu0 0.0
        %775 = vmatprep.subr.mxu0 0.0
        %776 = vmatpush2.msra.mxu0 0.0
        %777 = vmatprep.subr.mxu0 0.0
        %778 = vmatpush2.msra.mxu0 0.0
        %779 = vmatprep.subr.mxu0 0.0
        %780 = vmatpush2.msra.mxu0 0.0
        %781 = vmatprep.mubr.f32.mxu0 0.0
        %782 = vmatmul.mubr.f32.gmra.mxu0 %v715
        %v783 = vpop.f32.mrf.mxu0
        %v784 = vadd.f32 0.0, %v783
        %v785 = vpop.f32.mrf.mxu0
        %786 = vdwg.mxu0
        %v787 = vadd.f32 %v572, %v784
        %v789 = vsel %vm492, %v708, 0
        %791 = vmatprep.subr.mxu0 0.0
        %792 = vmatpush1.msra.mxu0 0.0
        %793 = vmatprep.subr.mxu0 0.0
        %794 = vmatpush1.msra.mxu0 0.0
        %795 = vmatprep.subr.mxu0 0.0
        %796 = vmatpush1.msra.mxu0 0.0
        %797 = vmatprep.subr.mxu0 0.0
        %798 = vmatpush1.msra.mxu0 0.0
        %799 = vmatprep.subr.mxu0 0.0
        %800 = vmatpush1.msra.mxu0 0.0
        %801 = vmatprep.subr.mxu0 0.0
        %802 = vmatpush1.msra.mxu0 0.0
        %803 = vmatprep.subr.mxu0 0.0
        %804 = vmatpush1.msra.mxu0 0.0
        %805 = vmatprep.subr.mxu0 0.0
        %806 = vmatpush1.msra.mxu0 0.0
        %807 = vmatprep.subr.mxu0 0.0
        %808 = vmatpush1.msra.mxu0 0.0
        %809 = vmatprep.subr.mxu0 0.0
        %810 = vmatpush1.msra.mxu0 0.0
        %811 = vmatprep.subr.mxu0 0.0
        %812 = vmatpush1.msra.mxu0 0.0
        %813 = vmatprep.subr.mxu0 0.0
        %814 = vmatpush1.msra.mxu0 0.0
        %815 = vmatprep.subr.mxu0 0.0
        %816 = vmatpush1.msra.mxu0 %v705
        %817 = vmatprep.subr.mxu0 0.0
        %818 = vmatpush1.msra.mxu0 %v704
        %819 = vmatprep.subr.mxu0 0.0
        %820 = vmatpush1.msra.mxu0 %v703
        %821 = vmatprep.subr.mxu0 0.0
        %822 = vmatpush1.msra.mxu0 %v702
        %823 = vmatprep.subr.mxu0 0.0
        %824 = vmatpush2.msra.mxu0 0.0
        %825 = vmatprep.subr.mxu0 0.0
        %826 = vmatpush2.msra.mxu0 0.0
        %827 = vmatprep.subr.mxu0 0.0
        %828 = vmatpush2.msra.mxu0 0.0
        %829 = vmatprep.subr.mxu0 0.0
        %830 = vmatpush2.msra.mxu0 0.0
        %831 = vmatprep.subr.mxu0 0.0
        %832 = vmatpush2.msra.mxu0 0.0
        %833 = vmatprep.subr.mxu0 0.0
        %834 = vmatpush2.msra.mxu0 0.0
        %835 = vmatprep.subr.mxu0 0.0
        %836 = vmatpush2.msra.mxu0 0.0
        %837 = vmatprep.subr.mxu0 0.0
        %838 = vmatpush2.msra.mxu0 0.0
        %839 = vmatprep.subr.mxu0 0.0
        %840 = vmatpush2.msra.mxu0 0.0
        %841 = vmatprep.subr.mxu0 0.0
        %842 = vmatpush2.msra.mxu0 0.0
        %843 = vmatprep.subr.mxu0 0.0
        %844 = vmatpush2.msra.mxu0 0.0
        %845 = vmatprep.subr.mxu0 0.0
        %846 = vmatpush2.msra.mxu0 0.0
        %847 = vmatprep.subr.mxu0 0.0
        %848 = vmatpush2.msra.mxu0 0.0
        %849 = vmatprep.subr.mxu0 0.0
        %850 = vmatpush2.msra.mxu0 0.0
        %851 = vmatprep.subr.mxu0 0.0
        %852 = vmatpush2.msra.mxu0 0.0
        %853 = vmatprep.subr.mxu0 0.0
        %854 = vmatpush2.msra.mxu0 0.0
        %855 = vmatprep.mubr.f32.mxu0 0.0
        %856 = vmatmul.mubr.f32.gmra.mxu0 %v789
        %v857 = vpop.f32.mrf.mxu0
        %v858 = vadd.f32 0.0, %v857
        %v859 = vpop.f32.mrf.mxu0
        %860 = vdwg.mxu0
        %v861 = vadd.f32 %v695, %v858
        %v862 = vxor.u32 %v787, 2147483648
        %v863 = vmul.f32 %v862, 1.442695
        %v864 = vpow.pop %v863
        %v865 = vadd.f32 %v864, 1.0
        %v866 = vrcp.pop %v865
        %v867 = vmul.f32 1.0, %v866
        %v868 = vtanh.pop %v787
        %v869 = vxor.u32 %v861, 2147483648
        %v870 = vmul.f32 %v869, 1.442695
        %v871 = vpow.pop %v870
        %v872 = vadd.f32 %v871, 1.0
        %v873 = vrcp.pop %v872
        %v874 = vmul.f32 1.0, %v873
        %v875 = vtanh.pop %v861
        %877 = vrot.lane.b32.xlu0 %v707, 32
        %v878 = vpop.permute.xlu0 %877
        %v880 = vmul.f32 %v867, %v878
        %882 = vrot.lane.b32.xlu0 %v868, 64
        %v883 = vpop.permute.xlu0 %882
        %v885 = vmul.f32 %v867, %v883
        %887 = vrot.lane.b32.xlu0 %v885, 32
        %v888 = vpop.permute.xlu0 %887
        %v890 = vadd.f32 %v880, %v888
        %892 = vrot.lane.b32.xlu0 %v709, 32
        %v893 = vpop.permute.xlu0 %892
        %v895 = vmul.f32 %v874, %v893
        %897 = vrot.lane.b32.xlu0 %v875, 64
        %v898 = vpop.permute.xlu0 %897
        %v900 = vmul.f32 %v874, %v898
        %902 = vrot.lane.b32.xlu0 %v900, 32
        %v903 = vpop.permute.xlu0 %902
        %v905 = vadd.f32 %v895, %v903
        %v906 = vtanh.pop %v890
        %908 = vrot.lane.b32.xlu0 %v906, 64
        %v909 = vpop.permute.xlu0 %908
        %v911 = vmul.f32 %v867, %v909
        %v912 = vtanh.pop %v905
        %914 = vrot.lane.b32.xlu0 %v912, 64
        %v915 = vpop.permute.xlu0 %914
        %v917 = vmul.f32 %v874, %v915
        %919 = vrot.lane.b32.xlu0 %v911, 32
        %v920 = vpop.permute.xlu0 %919
        %v922 = vadd.f32 %v710, %v920
        %924 = vrot.lane.b32.xlu0 %v917, 32
        %v925 = vpop.permute.xlu0 %924
        %v927 = vadd.f32 %v711, %v925
        %v928 = vmax.f32 %v712, %v920
        %v929 = vmax.f32 %v713, %v925
        %v930 = vsel %vm492, %v920, 0
        %932 = vmatprep.subr.mxu0 0.0
        %933 = vmatpush1.msra.mxu0 0.0
        %934 = vmatprep.subr.mxu0 0.0
        %935 = vmatpush1.msra.mxu0 0.0
        %936 = vmatprep.subr.mxu0 0.0
        %937 = vmatpush1.msra.mxu0 0.0
        %938 = vmatprep.subr.mxu0 0.0
        %939 = vmatpush1.msra.mxu0 0.0
        %940 = vmatprep.subr.mxu0 0.0
        %941 = vmatpush1.msra.mxu0 0.0
        %942 = vmatprep.subr.mxu0 0.0
        %943 = vmatpush1.msra.mxu0 0.0
        %944 = vmatprep.subr.mxu0 0.0
        %945 = vmatpush1.msra.mxu0 0.0
        %946 = vmatprep.subr.mxu0 0.0
        %947 = vmatpush1.msra.mxu0 0.0
        %948 = vmatprep.subr.mxu0 0.0
        %949 = vmatpush1.msra.mxu0 0.0
        %950 = vmatprep.subr.mxu0 0.0
        %951 = vmatpush1.msra.mxu0 0.0
        %952 = vmatprep.subr.mxu0 0.0
        %953 = vmatpush1.msra.mxu0 0.0
        %954 = vmatprep.subr.mxu0 0.0
        %955 = vmatpush1.msra.mxu0 0.0
        %956 = vmatprep.subr.mxu0 0.0
        %957 = vmatpush1.msra.mxu0 %v701
        %958 = vmatprep.subr.mxu0 0.0
        %959 = vmatpush1.msra.mxu0 %v700
        %960 = vmatprep.subr.mxu0 0.0
        %961 = vmatpush1.msra.mxu0 %v699
        %962 = vmatprep.subr.mxu0 0.0
        %963 = vmatpush1.msra.mxu0 %v698
        %964 = vmatprep.subr.mxu0 0.0
        %965 = vmatpush2.msra.mxu0 0.0
        %966 = vmatprep.subr.mxu0 0.0
        %967 = vmatpush2.msra.mxu0 0.0
        %968 = vmatprep.subr.mxu0 0.0
        %969 = vmatpush2.msra.mxu0 0.0
        %970 = vmatprep.subr.mxu0 0.0
        %971 = vmatpush2.msra.mxu0 0.0
        %972 = vmatprep.subr.mxu0 0.0
        %973 = vmatpush2.msra.mxu0 0.0
        %974 = vmatprep.subr.mxu0 0.0
        %975 = vmatpush2.msra.mxu0 0.0
        %976 = vmatprep.subr.mxu0 0.0
        %977 = vmatpush2.msra.mxu0 0.0
        %978 = vmatprep.subr.mxu0 0.0
        %979 = vmatpush2.msra.mxu0 0.0
        %980 = vmatprep.subr.mxu0 0.0
        %981 = vmatpush2.msra.mxu0 0.0
        %982 = vmatprep.subr.mxu0 0.0
        %983 = vmatpush2.msra.mxu0 0.0
        %984 = vmatprep.subr.mxu0 0.0
        %985 = vmatpush2.msra.mxu0 0.0
        %986 = vmatprep.subr.mxu0 0.0
        %987 = vmatpush2.msra.mxu0 0.0
        %988 = vmatprep.subr.mxu0 0.0
        %989 = vmatpush2.msra.mxu0 0.0
        %990 = vmatprep.subr.mxu0 0.0
        %991 = vmatpush2.msra.mxu0 0.0
        %992 = vmatprep.subr.mxu0 0.0
        %993 = vmatpush2.msra.mxu0 0.0
        %994 = vmatprep.subr.mxu0 0.0
        %995 = vmatpush2.msra.mxu0 0.0
        %996 = vmatprep.mubr.f32.mxu0 0.0
        %997 = vmatmul.mubr.f32.gmra.mxu0 %v930
        %v998 = vpop.f32.mrf.mxu0
        %v999 = vadd.f32 0.0, %v998
        %v1000 = vpop.f32.mrf.mxu0
        %1001 = vdwg.mxu0
        %v1002 = vadd.f32 %v577, %v999
        %v1003 = vsel %vm492, %v925, 0
        %1005 = vmatprep.subr.mxu0 0.0
        %1006 = vmatpush1.msra.mxu0 0.0
        %1007 = vmatprep.subr.mxu0 0.0
        %1008 = vmatpush1.msra.mxu0 0.0
        %1009 = vmatprep.subr.mxu0 0.0
        %1010 = vmatpush1.msra.mxu0 0.0
        %1011 = vmatprep.subr.mxu0 0.0
        %1012 = vmatpush1.msra.mxu0 0.0
        %1013 = vmatprep.subr.mxu0 0.0
        %1014 = vmatpush1.msra.mxu0 0.0
        %1015 = vmatprep.subr.mxu0 0.0
        %1016 = vmatpush1.msra.mxu0 0.0
        %1017 = vmatprep.subr.mxu0 0.0
        %1018 = vmatpush1.msra.mxu0 0.0
        %1019 = vmatprep.subr.mxu0 0.0
        %1020 = vmatpush1.msra.mxu0 0.0
        %1021 = vmatprep.subr.mxu0 0.0
        %1022 = vmatpush1.msra.mxu0 0.0
        %1023 = vmatprep.subr.mxu0 0.0
        %1024 = vmatpush1.msra.mxu0 0.0
        %1025 = vmatprep.subr.mxu0 0.0
        %1026 = vmatpush1.msra.mxu0 0.0
        %1027 = vmatprep.subr.mxu0 0.0
        %1028 = vmatpush1.msra.mxu0 0.0
        %1029 = vmatprep.subr.mxu0 0.0
        %1030 = vmatpush1.msra.mxu0 %v705
        %1031 = vmatprep.subr.mxu0 0.0
        %1032 = vmatpush1.msra.mxu0 %v704
        %1033 = vmatprep.subr.mxu0 0.0
        %1034 = vmatpush1.msra.mxu0 %v703
        %1035 = vmatprep.subr.mxu0 0.0
        %1036 = vmatpush1.msra.mxu0 %v702
        %1037 = vmatprep.subr.mxu0 0.0
        %1038 = vmatpush2.msra.mxu0 0.0
        %1039 = vmatprep.subr.mxu0 0.0
        %1040 = vmatpush2.msra.mxu0 0.0
        %1041 = vmatprep.subr.mxu0 0.0
        %1042 = vmatpush2.msra.mxu0 0.0
        %1043 = vmatprep.subr.mxu0 0.0
        %1044 = vmatpush2.msra.mxu0 0.0
        %1045 = vmatprep.subr.mxu0 0.0
        %1046 = vmatpush2.msra.mxu0 0.0
        %1047 = vmatprep.subr.mxu0 0.0
        %1048 = vmatpush2.msra.mxu0 0.0
        %1049 = vmatprep.subr.mxu0 0.0
        %1050 = vmatpush2.msra.mxu0 0.0
        %1051 = vmatprep.subr.mxu0 0.0
        %1052 = vmatpush2.msra.mxu0 0.0
        %1053 = vmatprep.subr.mxu0 0.0
        %1054 = vmatpush2.msra.mxu0 0.0
        %1055 = vmatprep.subr.mxu0 0.0
        %1056 = vmatpush2.msra.mxu0 0.0
        %1057 = vmatprep.subr.mxu0 0.0
        %1058 = vmatpush2.msra.mxu0 0.0
        %1059 = vmatprep.subr.mxu0 0.0
        %1060 = vmatpush2.msra.mxu0 0.0
        %1061 = vmatprep.subr.mxu0 0.0
        %1062 = vmatpush2.msra.mxu0 0.0
        %1063 = vmatprep.subr.mxu0 0.0
        %1064 = vmatpush2.msra.mxu0 0.0
        %1065 = vmatprep.subr.mxu0 0.0
        %1066 = vmatpush2.msra.mxu0 0.0
        %1067 = vmatprep.subr.mxu0 0.0
        %1068 = vmatpush2.msra.mxu0 0.0
        %1069 = vmatprep.mubr.f32.mxu0 0.0
        %1070 = vmatmul.mubr.f32.gmra.mxu0 %v1003
        %v1071 = vpop.f32.mrf.mxu0
        %v1072 = vadd.f32 0.0, %v1071
        %v1073 = vpop.f32.mrf.mxu0
        %1074 = vdwg.mxu0
        %v1075 = vadd.f32 %v690, %v1072
        %v1076 = vxor.u32 %v1002, 2147483648
        %v1077 = vmul.f32 %v1076, 1.442695
        %v1078 = vpow.pop %v1077
        %v1079 = vadd.f32 %v1078, 1.0
        %v1080 = vrcp.pop %v1079
        %v1081 = vmul.f32 1.0, %v1080
        %v1082 = vtanh.pop %v1002
        %v1083 = vxor.u32 %v1075, 2147483648
        %v1084 = vmul.f32 %v1083, 1.442695
        %v1085 = vpow.pop %v1084
        %v1086 = vadd.f32 %v1085, 1.0
        %v1087 = vrcp.pop %v1086
        %v1088 = vmul.f32 1.0, %v1087
        %v1089 = vtanh.pop %v1075
        %v1090 = vmul.f32 %v1081, %v890
        %1092 = vrot.lane.b32.xlu0 %v1082, 64
        %v1093 = vpop.permute.xlu0 %1092
        %v1095 = vmul.f32 %v1081, %v1093
        %1097 = vrot.lane.b32.xlu0 %v1095, 32
        %v1098 = vpop.permute.xlu0 %1097
        %v1100 = vadd.f32 %v1090, %v1098
        %v1101 = vmul.f32 %v1088, %v905
        %1103 = vrot.lane.b32.xlu0 %v1089, 64
        %v1104 = vpop.permute.xlu0 %1103
        %v1106 = vmul.f32 %v1088, %v1104
        %1108 = vrot.lane.b32.xlu0 %v1106, 32
        %v1109 = vpop.permute.xlu0 %1108
        %v1111 = vadd.f32 %v1101, %v1109
        %v1112 = vtanh.pop %v1100
        %1114 = vrot.lane.b32.xlu0 %v1112, 64
        %v1115 = vpop.permute.xlu0 %1114
        %v1117 = vmul.f32 %v1081, %v1115
        %v1118 = vtanh.pop %v1111
        %1120 = vrot.lane.b32.xlu0 %v1118, 64
        %v1121 = vpop.permute.xlu0 %1120
        %v1123 = vmul.f32 %v1088, %v1121
        %1125 = vrot.lane.b32.xlu0 %v1117, 32
        %v1126 = vpop.permute.xlu0 %1125
        %v1128 = vadd.f32 %v922, %v1126
        %1130 = vrot.lane.b32.xlu0 %v1123, 32
        %v1131 = vpop.permute.xlu0 %1130
        %v1133 = vadd.f32 %v927, %v1131
        %v1134 = vmax.f32 %v928, %v1126
        %v1135 = vmax.f32 %v929, %v1131
        %v1136 = vsel %vm492, %v1126, 0
        %1138 = vmatprep.subr.mxu0 0.0
        %1139 = vmatpush1.msra.mxu0 0.0
        %1140 = vmatprep.subr.mxu0 0.0
        %1141 = vmatpush1.msra.mxu0 0.0
        %1142 = vmatprep.subr.mxu0 0.0
        %1143 = vmatpush1.msra.mxu0 0.0
        %1144 = vmatprep.subr.mxu0 0.0
        %1145 = vmatpush1.msra.mxu0 0.0
        %1146 = vmatprep.subr.mxu0 0.0
        %1147 = vmatpush1.msra.mxu0 0.0
        %1148 = vmatprep.subr.mxu0 0.0
        %1149 = vmatpush1.msra.mxu0 0.0
        %1150 = vmatprep.subr.mxu0 0.0
        %1151 = vmatpush1.msra.mxu0 0.0
        %1152 = vmatprep.subr.mxu0 0.0
        %1153 = vmatpush1.msra.mxu0 0.0
        %1154 = vmatprep.subr.mxu0 0.0
        %1155 = vmatpush1.msra.mxu0 0.0
        %1156 = vmatprep.subr.mxu0 0.0
        %1157 = vmatpush1.msra.mxu0 0.0
        %1158 = vmatprep.subr.mxu0 0.0
        %1159 = vmatpush1.msra.mxu0 0.0
        %1160 = vmatprep.subr.mxu0 0.0
        %1161 = vmatpush1.msra.mxu0 0.0
        %1162 = vmatprep.subr.mxu0 0.0
        %1163 = vmatpush1.msra.mxu0 %v701
        %1164 = vmatprep.subr.mxu0 0.0
        %1165 = vmatpush1.msra.mxu0 %v700
        %1166 = vmatprep.subr.mxu0 0.0
        %1167 = vmatpush1.msra.mxu0 %v699
        %1168 = vmatprep.subr.mxu0 0.0
        %1169 = vmatpush1.msra.mxu0 %v698
        %1170 = vmatprep.subr.mxu0 0.0
        %1171 = vmatpush2.msra.mxu0 0.0
        %1172 = vmatprep.subr.mxu0 0.0
        %1173 = vmatpush2.msra.mxu0 0.0
        %1174 = vmatprep.subr.mxu0 0.0
        %1175 = vmatpush2.msra.mxu0 0.0
        %1176 = vmatprep.subr.mxu0 0.0
        %1177 = vmatpush2.msra.mxu0 0.0
        %1178 = vmatprep.subr.mxu0 0.0
        %1179 = vmatpush2.msra.mxu0 0.0
        %1180 = vmatprep.subr.mxu0 0.0
        %1181 = vmatpush2.msra.mxu0 0.0
        %1182 = vmatprep.subr.mxu0 0.0
        %1183 = vmatpush2.msra.mxu0 0.0
        %1184 = vmatprep.subr.mxu0 0.0
        %1185 = vmatpush2.msra.mxu0 0.0
        %1186 = vmatprep.subr.mxu0 0.0
        %1187 = vmatpush2.msra.mxu0 0.0
        %1188 = vmatprep.subr.mxu0 0.0
        %1189 = vmatpush2.msra.mxu0 0.0
        %1190 = vmatprep.subr.mxu0 0.0
        %1191 = vmatpush2.msra.mxu0 0.0
        %1192 = vmatprep.subr.mxu0 0.0
        %1193 = vmatpush2.msra.mxu0 0.0
        %1194 = vmatprep.subr.mxu0 0.0
        %1195 = vmatpush2.msra.mxu0 0.0
        %1196 = vmatprep.subr.mxu0 0.0
        %1197 = vmatpush2.msra.mxu0 0.0
        %1198 = vmatprep.subr.mxu0 0.0
        %1199 = vmatpush2.msra.mxu0 0.0
        %1200 = vmatprep.subr.mxu0 0.0
        %1201 = vmatpush2.msra.mxu0 0.0
        %1202 = vmatprep.mubr.f32.mxu0 0.0
        %1203 = vmatmul.mubr.f32.gmra.mxu0 %v1136
        %v1204 = vpop.f32.mrf.mxu0
        %v1205 = vadd.f32 0.0, %v1204
        %v1206 = vpop.f32.mrf.mxu0
        %1207 = vdwg.mxu0
        %v1208 = vadd.f32 %v582, %v1205
        %v1209 = vsel %vm492, %v1131, 0
        %1211 = vmatprep.subr.mxu0 0.0
        %1212 = vmatpush1.msra.mxu0 0.0
        %1213 = vmatprep.subr.mxu0 0.0
        %1214 = vmatpush1.msra.mxu0 0.0
        %1215 = vmatprep.subr.mxu0 0.0
        %1216 = vmatpush1.msra.mxu0 0.0
        %1217 = vmatprep.subr.mxu0 0.0
        %1218 = vmatpush1.msra.mxu0 0.0
        %1219 = vmatprep.subr.mxu0 0.0
        %1220 = vmatpush1.msra.mxu0 0.0
        %1221 = vmatprep.subr.mxu0 0.0
        %1222 = vmatpush1.msra.mxu0 0.0
        %1223 = vmatprep.subr.mxu0 0.0
        %1224 = vmatpush1.msra.mxu0 0.0
        %1225 = vmatprep.subr.mxu0 0.0
        %1226 = vmatpush1.msra.mxu0 0.0
        %1227 = vmatprep.subr.mxu0 0.0
        %1228 = vmatpush1.msra.mxu0 0.0
        %1229 = vmatprep.subr.mxu0 0.0
        %1230 = vmatpush1.msra.mxu0 0.0
        %1231 = vmatprep.subr.mxu0 0.0
        %1232 = vmatpush1.msra.mxu0 0.0
        %1233 = vmatprep.subr.mxu0 0.0
        %1234 = vmatpush1.msra.mxu0 0.0
        %1235 = vmatprep.subr.mxu0 0.0
        %1236 = vmatpush1.msra.mxu0 %v705
        %1237 = vmatprep.subr.mxu0 0.0
        %1238 = vmatpush1.msra.mxu0 %v704
        %1239 = vmatprep.subr.mxu0 0.0
        %1240 = vmatpush1.msra.mxu0 %v703
        %1241 = vmatprep.subr.mxu0 0.0
        %1242 = vmatpush1.msra.mxu0 %v702
        %1243 = vmatprep.subr.mxu0 0.0
        %1244 = vmatpush2.msra.mxu0 0.0
        %1245 = vmatprep.subr.mxu0 0.0
        %1246 = vmatpush2.msra.mxu0 0.0
        %1247 = vmatprep.subr.mxu0 0.0
        %1248 = vmatpush2.msra.mxu0 0.0
        %1249 = vmatprep.subr.mxu0 0.0
        %1250 = vmatpush2.msra.mxu0 0.0
        %1251 = vmatprep.subr.mxu0 0.0
        %1252 = vmatpush2.msra.mxu0 0.0
        %1253 = vmatprep.subr.mxu0 0.0
        %1254 = vmatpush2.msra.mxu0 0.0
        %1255 = vmatprep.subr.mxu0 0.0
        %1256 = vmatpush2.msra.mxu0 0.0
        %1257 = vmatprep.subr.mxu0 0.0
        %1258 = vmatpush2.msra.mxu0 0.0
        %1259 = vmatprep.subr.mxu0 0.0
        %1260 = vmatpush2.msra.mxu0 0.0
        %1261 = vmatprep.subr.mxu0 0.0
        %1262 = vmatpush2.msra.mxu0 0.0
        %1263 = vmatprep.subr.mxu0 0.0
        %1264 = vmatpush2.msra.mxu0 0.0
        %1265 = vmatprep.subr.mxu0 0.0
        %1266 = vmatpush2.msra.mxu0 0.0
        %1267 = vmatprep.subr.mxu0 0.0
        %1268 = vmatpush2.msra.mxu0 0.0
        %1269 = vmatprep.subr.mxu0 0.0
        %1270 = vmatpush2.msra.mxu0 0.0
        %1271 = vmatprep.subr.mxu0 0.0
        %1272 = vmatpush2.msra.mxu0 0.0
        %1273 = vmatprep.subr.mxu0 0.0
        %1274 = vmatpush2.msra.mxu0 0.0
        %1275 = vmatprep.mubr.f32.mxu0 0.0
        %1276 = vmatmul.mubr.f32.gmra.mxu0 %v1209
        %v1277 = vpop.f32.mrf.mxu0
        %v1278 = vadd.f32 0.0, %v1277
        %v1279 = vpop.f32.mrf.mxu0
        %1280 = vdwg.mxu0
        %v1281 = vadd.f32 %v685, %v1278
        %v1282 = vxor.u32 %v1208, 2147483648
        %v1283 = vmul.f32 %v1282, 1.442695
        %v1284 = vpow.pop %v1283
        %v1285 = vadd.f32 %v1284, 1.0
        %v1286 = vrcp.pop %v1285
        %v1287 = vmul.f32 1.0, %v1286
        %v1288 = vtanh.pop %v1208
        %v1289 = vxor.u32 %v1281, 2147483648
        %v1290 = vmul.f32 %v1289, 1.442695
        %v1291 = vpow.pop %v1290
        %v1292 = vadd.f32 %v1291, 1.0
        %v1293 = vrcp.pop %v1292
        %v1294 = vmul.f32 1.0, %v1293
        %v1295 = vtanh.pop %v1281
        %v1296 = vmul.f32 %v1287, %v1100
        %1298 = vrot.lane.b32.xlu0 %v1288, 64
        %v1299 = vpop.permute.xlu0 %1298
        %v1301 = vmul.f32 %v1287, %v1299
        %1303 = vrot.lane.b32.xlu0 %v1301, 32
        %v1304 = vpop.permute.xlu0 %1303
        %v1306 = vadd.f32 %v1296, %v1304
        %v1307 = vmul.f32 %v1294, %v1111
        %1309 = vrot.lane.b32.xlu0 %v1295, 64
        %v1310 = vpop.permute.xlu0 %1309
        %v1312 = vmul.f32 %v1294, %v1310
        %1314 = vrot.lane.b32.xlu0 %v1312, 32
        %v1315 = vpop.permute.xlu0 %1314
        %v1317 = vadd.f32 %v1307, %v1315
        %v1318 = vtanh.pop %v1306
        %1320 = vrot.lane.b32.xlu0 %v1318, 64
        %v1321 = vpop.permute.xlu0 %1320
        %v1323 = vmul.f32 %v1287, %v1321
        %v1324 = vtanh.pop %v1317
        %1326 = vrot.lane.b32.xlu0 %v1324, 64
        %v1327 = vpop.permute.xlu0 %1326
        %v1329 = vmul.f32 %v1294, %v1327
        %1331 = vrot.lane.b32.xlu0 %v1323, 32
        %v1332 = vpop.permute.xlu0 %1331
        %v1334 = vadd.f32 %v1128, %v1332
        %1336 = vrot.lane.b32.xlu0 %v1329, 32
        %v1337 = vpop.permute.xlu0 %1336
        %v1339 = vadd.f32 %v1133, %v1337
        %v1340 = vmax.f32 %v1134, %v1332
        %v1341 = vmax.f32 %v1135, %v1337
        %v1342 = vsel %vm492, %v1332, 0
        %1344 = vmatprep.subr.mxu0 0.0
        %1345 = vmatpush1.msra.mxu0 0.0
        %1346 = vmatprep.subr.mxu0 0.0
        %1347 = vmatpush1.msra.mxu0 0.0
        %1348 = vmatprep.subr.mxu0 0.0
        %1349 = vmatpush1.msra.mxu0 0.0
        %1350 = vmatprep.subr.mxu0 0.0
        %1351 = vmatpush1.msra.mxu0 0.0
        %1352 = vmatprep.subr.mxu0 0.0
        %1353 = vmatpush1.msra.mxu0 0.0
        %1354 = vmatprep.subr.mxu0 0.0
        %1355 = vmatpush1.msra.mxu0 0.0
        %1356 = vmatprep.subr.mxu0 0.0
        %1357 = vmatpush1.msra.mxu0 0.0
        %1358 = vmatprep.subr.mxu0 0.0
        %1359 = vmatpush1.msra.mxu0 0.0
        %1360 = vmatprep.subr.mxu0 0.0
        %1361 = vmatpush1.msra.mxu0 0.0
        %1362 = vmatprep.subr.mxu0 0.0
        %1363 = vmatpush1.msra.mxu0 0.0
        %1364 = vmatprep.subr.mxu0 0.0
        %1365 = vmatpush1.msra.mxu0 0.0
        %1366 = vmatprep.subr.mxu0 0.0
        %1367 = vmatpush1.msra.mxu0 0.0
        %1368 = vmatprep.subr.mxu0 0.0
        %1369 = vmatpush1.msra.mxu0 %v701
        %1370 = vmatprep.subr.mxu0 0.0
        %1371 = vmatpush1.msra.mxu0 %v700
        %1372 = vmatprep.subr.mxu0 0.0
        %1373 = vmatpush1.msra.mxu0 %v699
        %1374 = vmatprep.subr.mxu0 0.0
        %1375 = vmatpush1.msra.mxu0 %v698
        %1376 = vmatprep.subr.mxu0 0.0
        %1377 = vmatpush2.msra.mxu0 0.0
        %1378 = vmatprep.subr.mxu0 0.0
        %1379 = vmatpush2.msra.mxu0 0.0
        %1380 = vmatprep.subr.mxu0 0.0
        %1381 = vmatpush2.msra.mxu0 0.0
        %1382 = vmatprep.subr.mxu0 0.0
        %1383 = vmatpush2.msra.mxu0 0.0
        %1384 = vmatprep.subr.mxu0 0.0
        %1385 = vmatpush2.msra.mxu0 0.0
        %1386 = vmatprep.subr.mxu0 0.0
        %1387 = vmatpush2.msra.mxu0 0.0
        %1388 = vmatprep.subr.mxu0 0.0
        %1389 = vmatpush2.msra.mxu0 0.0
        %1390 = vmatprep.subr.mxu0 0.0
        %1391 = vmatpush2.msra.mxu0 0.0
        %1392 = vmatprep.subr.mxu0 0.0
        %1393 = vmatpush2.msra.mxu0 0.0
        %1394 = vmatprep.subr.mxu0 0.0
        %1395 = vmatpush2.msra.mxu0 0.0
        %1396 = vmatprep.subr.mxu0 0.0
        %1397 = vmatpush2.msra.mxu0 0.0
        %1398 = vmatprep.subr.mxu0 0.0
        %1399 = vmatpush2.msra.mxu0 0.0
        %1400 = vmatprep.subr.mxu0 0.0
        %1401 = vmatpush2.msra.mxu0 0.0
        %1402 = vmatprep.subr.mxu0 0.0
        %1403 = vmatpush2.msra.mxu0 0.0
        %1404 = vmatprep.subr.mxu0 0.0
        %1405 = vmatpush2.msra.mxu0 0.0
        %1406 = vmatprep.subr.mxu0 0.0
        %1407 = vmatpush2.msra.mxu0 0.0
        %1408 = vmatprep.mubr.f32.mxu0 0.0
        %1409 = vmatmul.mubr.f32.gmra.mxu0 %v1342
        %v1410 = vpop.f32.mrf.mxu0
        %v1411 = vadd.f32 0.0, %v1410
        %v1412 = vpop.f32.mrf.mxu0
        %1413 = vdwg.mxu0
        %v1414 = vadd.f32 %v587, %v1411
        %v1415 = vsel %vm492, %v1337, 0
        %1417 = vmatprep.subr.mxu0 0.0
        %1418 = vmatpush1.msra.mxu0 0.0
        %1419 = vmatprep.subr.mxu0 0.0
        %1420 = vmatpush1.msra.mxu0 0.0
        %1421 = vmatprep.subr.mxu0 0.0
        %1422 = vmatpush1.msra.mxu0 0.0
        %1423 = vmatprep.subr.mxu0 0.0
        %1424 = vmatpush1.msra.mxu0 0.0
        %1425 = vmatprep.subr.mxu0 0.0
        %1426 = vmatpush1.msra.mxu0 0.0
        %1427 = vmatprep.subr.mxu0 0.0
        %1428 = vmatpush1.msra.mxu0 0.0
        %1429 = vmatprep.subr.mxu0 0.0
        %1430 = vmatpush1.msra.mxu0 0.0
        %1431 = vmatprep.subr.mxu0 0.0
        %1432 = vmatpush1.msra.mxu0 0.0
        %1433 = vmatprep.subr.mxu0 0.0
        %1434 = vmatpush1.msra.mxu0 0.0
        %1435 = vmatprep.subr.mxu0 0.0
        %1436 = vmatpush1.msra.mxu0 0.0
        %1437 = vmatprep.subr.mxu0 0.0
        %1438 = vmatpush1.msra.mxu0 0.0
        %1439 = vmatprep.subr.mxu0 0.0
        %1440 = vmatpush1.msra.mxu0 0.0
        %1441 = vmatprep.subr.mxu0 0.0
        %1442 = vmatpush1.msra.mxu0 %v705
        %1443 = vmatprep.subr.mxu0 0.0
        %1444 = vmatpush1.msra.mxu0 %v704
        %1445 = vmatprep.subr.mxu0 0.0
        %1446 = vmatpush1.msra.mxu0 %v703
        %1447 = vmatprep.subr.mxu0 0.0
        %1448 = vmatpush1.msra.mxu0 %v702
        %1449 = vmatprep.subr.mxu0 0.0
        %1450 = vmatpush2.msra.mxu0 0.0
        %1451 = vmatprep.subr.mxu0 0.0
        %1452 = vmatpush2.msra.mxu0 0.0
        %1453 = vmatprep.subr.mxu0 0.0
        %1454 = vmatpush2.msra.mxu0 0.0
        %1455 = vmatprep.subr.mxu0 0.0
        %1456 = vmatpush2.msra.mxu0 0.0
        %1457 = vmatprep.subr.mxu0 0.0
        %1458 = vmatpush2.msra.mxu0 0.0
        %1459 = vmatprep.subr.mxu0 0.0
        %1460 = vmatpush2.msra.mxu0 0.0
        %1461 = vmatprep.subr.mxu0 0.0
        %1462 = vmatpush2.msra.mxu0 0.0
        %1463 = vmatprep.subr.mxu0 0.0
        %1464 = vmatpush2.msra.mxu0 0.0
        %1465 = vmatprep.subr.mxu0 0.0
        %1466 = vmatpush2.msra.mxu0 0.0
        %1467 = vmatprep.subr.mxu0 0.0
        %1468 = vmatpush2.msra.mxu0 0.0
        %1469 = vmatprep.subr.mxu0 0.0
        %1470 = vmatpush2.msra.mxu0 0.0
        %1471 = vmatprep.subr.mxu0 0.0
        %1472 = vmatpush2.msra.mxu0 0.0
        %1473 = vmatprep.subr.mxu0 0.0
        %1474 = vmatpush2.msra.mxu0 0.0
        %1475 = vmatprep.subr.mxu0 0.0
        %1476 = vmatpush2.msra.mxu0 0.0
        %1477 = vmatprep.subr.mxu0 0.0
        %1478 = vmatpush2.msra.mxu0 0.0
        %1479 = vmatprep.subr.mxu0 0.0
        %1480 = vmatpush2.msra.mxu0 0.0
        %1481 = vmatprep.mubr.f32.mxu0 0.0
        %1482 = vmatmul.mubr.f32.gmra.mxu0 %v1415
        %v1483 = vpop.f32.mrf.mxu0
        %v1484 = vadd.f32 0.0, %v1483
        %v1485 = vpop.f32.mrf.mxu0
        %1486 = vdwg.mxu0
        %v1487 = vadd.f32 %v680, %v1484
        %v1488 = vxor.u32 %v1414, 2147483648
        %v1489 = vmul.f32 %v1488, 1.442695
        %v1490 = vpow.pop %v1489
        %v1491 = vadd.f32 %v1490, 1.0
        %v1492 = vrcp.pop %v1491
        %v1493 = vmul.f32 1.0, %v1492
        %v1494 = vtanh.pop %v1414
        %v1495 = vxor.u32 %v1487, 2147483648
        %v1496 = vmul.f32 %v1495, 1.442695
        %v1497 = vpow.pop %v1496
        %v1498 = vadd.f32 %v1497, 1.0
        %v1499 = vrcp.pop %v1498
        %v1500 = vmul.f32 1.0, %v1499
        %v1501 = vtanh.pop %v1487
        %v1502 = vmul.f32 %v1493, %v1306
        %1504 = vrot.lane.b32.xlu0 %v1494, 64
        %v1505 = vpop.permute.xlu0 %1504
        %v1507 = vmul.f32 %v1493, %v1505
        %1509 = vrot.lane.b32.xlu0 %v1507, 32
        %v1510 = vpop.permute.xlu0 %1509
        %v1512 = vadd.f32 %v1502, %v1510
        %v1513 = vmul.f32 %v1500, %v1317
        %1515 = vrot.lane.b32.xlu0 %v1501, 64
        %v1516 = vpop.permute.xlu0 %1515
        %v1518 = vmul.f32 %v1500, %v1516
        %1520 = vrot.lane.b32.xlu0 %v1518, 32
        %v1521 = vpop.permute.xlu0 %1520
        %v1523 = vadd.f32 %v1513, %v1521
        %v1524 = vtanh.pop %v1512
        %1526 = vrot.lane.b32.xlu0 %v1524, 64
        %v1527 = vpop.permute.xlu0 %1526
        %v1529 = vmul.f32 %v1493, %v1527
        %v1530 = vtanh.pop %v1523
        %1532 = vrot.lane.b32.xlu0 %v1530, 64
        %v1533 = vpop.permute.xlu0 %1532
        %v1535 = vmul.f32 %v1500, %v1533
        %1537 = vrot.lane.b32.xlu0 %v1529, 32
        %v1538 = vpop.permute.xlu0 %1537
        %v1540 = vadd.f32 %v1334, %v1538
        %1542 = vrot.lane.b32.xlu0 %v1535, 32
        %v1543 = vpop.permute.xlu0 %1542
        %v1545 = vadd.f32 %v1339, %v1543
        %v1546 = vmax.f32 %v1340, %v1538
        %v1547 = vmax.f32 %v1341, %v1543
        %1548 = vst.msk [vmem:[#allocation2] sm:$0xff] %vm492, %v1538
        %1550 = vrot.lane.b32.xlu0 %v1512, 96
        %v1551 = vpop.permute.xlu0 %1550
        %1553 = vst.msk [vmem:[#allocation3] sm:$0xff] %vm492, %v1551
        %1554 = vst.msk [vmem:[#allocation4] sm:$0xff] %vm492, %v1543
        %1556 = vrot.lane.b32.xlu0 %v1523, 96
        %v1557 = vpop.permute.xlu0 %1556
        %1559 = vst.msk [vmem:[#allocation5] sm:$0xff] %vm492, %v1557
        %1560 = vst.msk [vmem:[#allocation6] sm:$0xff] %vm492, %v1540
        %1561 = vst.msk [vmem:[#allocation7] sm:$0xff] %vm492, %v1545
        %1562 = vst.msk [vmem:[#allocation8] sm:$0xff] %vm492, %v1546
        %1563 = vst.msk [vmem:[#allocation9] sm:$0xff] %vm492, %v1547
        %p1564 = scmp.eq.s32.totalorder %s29, 1
        // Predicated region
        $region77: #{tpu_custom_call.1} parent=59 // pred_check
          %p1565 = pneg %p1564
        $region78: #{tpu_custom_call.1} parent=59 // pred_check_branch
          %1567 = sbr.rel (%p1565) target = $region80
        $region79: #{tpu_custom_call.1} parent=59 // pred_region
          %v1568 = vmul.f32 %v1540, 0.125
          %v1569 = vmul.f32 %v1545, 0.125
          %v1570 = vld [vmem:[%s8] sm:$0xff]
          %v1571 = vld [vmem:[%s8 + $0x8] sm:$0xff]
          %v1572 = vld [vmem:[%s8 + $0x10] sm:$0xff]
          %v1573 = vld [vmem:[%s8 + $0x18] sm:$0xff]
          %v1574 = vld [vmem:[%s8 + $0x20] sm:$0xff]
          %v1575 = vld [vmem:[%s8 + $0x28] sm:$0xff]
          %v1576 = vld [vmem:[%s8 + $0x30] sm:$0xff]
          %v1577 = vld [vmem:[%s8 + $0x38] sm:$0xff]
          %v1578 = vld [vmem:[%s8 + $0x40] sm:$0xff]
          %v1579 = vld [vmem:[%s8 + $0x48] sm:$0xff]
          %v1580 = vld [vmem:[%s8 + $0x50] sm:$0xff]
          %v1581 = vld [vmem:[%s8 + $0x58] sm:$0xff]
          %v1582 = vld [vmem:[%s8 + $0x60] sm:$0xff]
          %v1583 = vld [vmem:[%s8 + $0x68] sm:$0xff]
          %v1584 = vld [vmem:[%s8 + $0x70] sm:$0xff]
          %v1585 = vld [vmem:[%s8 + $0x78] sm:$0xff]
          %v1587 = vsel %vm492, %v1569, 0
          %1589 = vmatprep.subr.mxu0 0.0
          %1590 = vmatpush1.msra.mxu0 0.0
          %1591 = vmatprep.subr.mxu0 0.0
          %1592 = vmatpush1.msra.mxu0 0.0
          %1593 = vmatprep.subr.mxu0 0.0
          %1594 = vmatpush1.msra.mxu0 0.0
          %1595 = vmatprep.subr.mxu0 0.0
          %1596 = vmatpush1.msra.mxu0 0.0
          %1597 = vmatprep.subr.mxu0 0.0
          %1598 = vmatpush1.msra.mxu0 0.0
          %1599 = vmatprep.subr.mxu0 0.0
          %1600 = vmatpush1.msra.mxu0 0.0
          %1601 = vmatprep.subr.mxu0 0.0
          %1602 = vmatpush1.msra.mxu0 0.0
          %1603 = vmatprep.subr.mxu0 0.0
          %1604 = vmatpush1.msra.mxu0 0.0
          %1605 = vmatprep.subr.mxu0 0.0
          %1606 = vmatpush1.msra.mxu0 0.0
          %1607 = vmatprep.subr.mxu0 0.0
          %1608 = vmatpush1.msra.mxu0 0.0
          %1609 = vmatprep.subr.mxu0 0.0
          %1610 = vmatpush1.msra.mxu0 0.0
          %1611 = vmatprep.subr.mxu0 0.0
          %1612 = vmatpush1.msra.mxu0 0.0
          %1613 = vmatprep.subr.mxu0 0.0
          %1614 = vmatpush1.msra.mxu0 %v1577
          %1615 = vmatprep.subr.mxu0 0.0
          %1616 = vmatpush1.msra.mxu0 %v1576
          %1617 = vmatprep.subr.mxu0 0.0
          %1618 = vmatpush1.msra.mxu0 %v1575
          %1619 = vmatprep.subr.mxu0 0.0
          %1620 = vmatpush1.msra.mxu0 %v1574
          %1621 = vmatprep.subr.mxu0 0.0
          %1622 = vmatpush2.msra.mxu0 0.0
          %1623 = vmatprep.subr.mxu0 0.0
          %1624 = vmatpush2.msra.mxu0 0.0
          %1625 = vmatprep.subr.mxu0 0.0
          %1626 = vmatpush2.msra.mxu0 0.0
          %1627 = vmatprep.subr.mxu0 0.0
          %1628 = vmatpush2.msra.mxu0 0.0
          %1629 = vmatprep.subr.mxu0 0.0
          %1630 = vmatpush2.msra.mxu0 0.0
          %1631 = vmatprep.subr.mxu0 0.0
          %1632 = vmatpush2.msra.mxu0 0.0
          %1633 = vmatprep.subr.mxu0 0.0
          %1634 = vmatpush2.msra.mxu0 0.0
          %1635 = vmatprep.subr.mxu0 0.0
          %1636 = vmatpush2.msra.mxu0 0.0
          %1637 = vmatprep.subr.mxu0 0.0
          %1638 = vmatpush2.msra.mxu0 0.0
          %1639 = vmatprep.subr.mxu0 0.0
          %1640 = vmatpush2.msra.mxu0 0.0
          %1641 = vmatprep.subr.mxu0 0.0
          %1642 = vmatpush2.msra.mxu0 0.0
          %1643 = vmatprep.subr.mxu0 0.0
          %1644 = vmatpush2.msra.mxu0 0.0
          %1645 = vmatprep.subr.mxu0 0.0
          %1646 = vmatpush2.msra.mxu0 0.0
          %1647 = vmatprep.subr.mxu0 0.0
          %1648 = vmatpush2.msra.mxu0 0.0
          %1649 = vmatprep.subr.mxu0 0.0
          %1650 = vmatpush2.msra.mxu0 0.0
          %1651 = vmatprep.subr.mxu0 0.0
          %1652 = vmatpush2.msra.mxu0 0.0
          %1653 = vmatprep.mubr.f32.mxu0 0.0
          %1654 = vmatmul.mubr.f32.gmra.mxu0 %v1587
          %v1655 = vpop.f32.mrf.mxu0
          %v1656 = vadd.f32 0.0, %v1655
          %v1657 = vpop.f32.mrf.mxu0
          %1658 = vdwg.mxu0
          %v1660 = vsel %vm492, %v1568, 0
          %1662 = vmatprep.subr.mxu0 0.0
          %1663 = vmatpush1.msra.mxu0 0.0
          %1664 = vmatprep.subr.mxu0 0.0
          %1665 = vmatpush1.msra.mxu0 0.0
          %1666 = vmatprep.subr.mxu0 0.0
          %1667 = vmatpush1.msra.mxu0 0.0
          %1668 = vmatprep.subr.mxu0 0.0
          %1669 = vmatpush1.msra.mxu0 0.0
          %1670 = vmatprep.subr.mxu0 0.0
          %1671 = vmatpush1.msra.mxu0 0.0
          %1672 = vmatprep.subr.mxu0 0.0
          %1673 = vmatpush1.msra.mxu0 0.0
          %1674 = vmatprep.subr.mxu0 0.0
          %1675 = vmatpush1.msra.mxu0 0.0
          %1676 = vmatprep.subr.mxu0 0.0
          %1677 = vmatpush1.msra.mxu0 0.0
          %1678 = vmatprep.subr.mxu0 0.0
          %1679 = vmatpush1.msra.mxu0 0.0
          %1680 = vmatprep.subr.mxu0 0.0
          %1681 = vmatpush1.msra.mxu0 0.0
          %1682 = vmatprep.subr.mxu0 0.0
          %1683 = vmatpush1.msra.mxu0 0.0
          %1684 = vmatprep.subr.mxu0 0.0
          %1685 = vmatpush1.msra.mxu0 0.0
          %1686 = vmatprep.subr.mxu0 0.0
          %1687 = vmatpush1.msra.mxu0 %v1573
          %1688 = vmatprep.subr.mxu0 0.0
          %1689 = vmatpush1.msra.mxu0 %v1572
          %1690 = vmatprep.subr.mxu0 0.0
          %1691 = vmatpush1.msra.mxu0 %v1571
          %1692 = vmatprep.subr.mxu0 0.0
          %1693 = vmatpush1.msra.mxu0 %v1570
          %1694 = vmatprep.subr.mxu0 0.0
          %1695 = vmatpush2.msra.mxu0 0.0
          %1696 = vmatprep.subr.mxu0 0.0
          %1697 = vmatpush2.msra.mxu0 0.0
          %1698 = vmatprep.subr.mxu0 0.0
          %1699 = vmatpush2.msra.mxu0 0.0
          %1700 = vmatprep.subr.mxu0 0.0
          %1701 = vmatpush2.msra.mxu0 0.0
          %1702 = vmatprep.subr.mxu0 0.0
          %1703 = vmatpush2.msra.mxu0 0.0
          %1704 = vmatprep.subr.mxu0 0.0
          %1705 = vmatpush2.msra.mxu0 0.0
          %1706 = vmatprep.subr.mxu0 0.0
          %1707 = vmatpush2.msra.mxu0 0.0
          %1708 = vmatprep.subr.mxu0 0.0
          %1709 = vmatpush2.msra.mxu0 0.0
          %1710 = vmatprep.subr.mxu0 0.0
          %1711 = vmatpush2.msra.mxu0 0.0
          %1712 = vmatprep.subr.mxu0 0.0
          %1713 = vmatpush2.msra.mxu0 0.0
          %1714 = vmatprep.subr.mxu0 0.0
          %1715 = vmatpush2.msra.mxu0 0.0
          %1716 = vmatprep.subr.mxu0 0.0
          %1717 = vmatpush2.msra.mxu0 0.0
          %1718 = vmatprep.subr.mxu0 0.0
          %1719 = vmatpush2.msra.mxu0 0.0
          %1720 = vmatprep.subr.mxu0 0.0
          %1721 = vmatpush2.msra.mxu0 0.0
          %1722 = vmatprep.subr.mxu0 0.0
          %1723 = vmatpush2.msra.mxu0 0.0
          %1724 = vmatprep.subr.mxu0 0.0
          %1725 = vmatpush2.msra.mxu0 0.0
          %1726 = vmatprep.mubr.f32.mxu0 0.0
          %1727 = vmatmul.mubr.f32.gmra.mxu0 %v1660
          %v1728 = vpop.f32.mrf.mxu0
          %v1729 = vadd.f32 %v1656, %v1728
          %v1730 = vpop.f32.mrf.mxu0
          %1731 = vdwg.mxu0
          %v1733 = vsel %vm492, %v1546, 0
          %1735 = vmatprep.subr.mxu0 0.0
          %1736 = vmatpush1.msra.mxu0 0.0
          %1737 = vmatprep.subr.mxu0 0.0
          %1738 = vmatpush1.msra.mxu0 0.0
          %1739 = vmatprep.subr.mxu0 0.0
          %1740 = vmatpush1.msra.mxu0 0.0
          %1741 = vmatprep.subr.mxu0 0.0
          %1742 = vmatpush1.msra.mxu0 0.0
          %1743 = vmatprep.subr.mxu0 0.0
          %1744 = vmatpush1.msra.mxu0 0.0
          %1745 = vmatprep.subr.mxu0 0.0
          %1746 = vmatpush1.msra.mxu0 0.0
          %1747 = vmatprep.subr.mxu0 0.0
          %1748 = vmatpush1.msra.mxu0 0.0
          %1749 = vmatprep.subr.mxu0 0.0
          %1750 = vmatpush1.msra.mxu0 0.0
          %1751 = vmatprep.subr.mxu0 0.0
          %1752 = vmatpush1.msra.mxu0 0.0
          %1753 = vmatprep.subr.mxu0 0.0
          %1754 = vmatpush1.msra.mxu0 0.0
          %1755 = vmatprep.subr.mxu0 0.0
          %1756 = vmatpush1.msra.mxu0 0.0
          %1757 = vmatprep.subr.mxu0 0.0
          %1758 = vmatpush1.msra.mxu0 0.0
          %1759 = vmatprep.subr.mxu0 0.0
          %1760 = vmatpush1.msra.mxu0 %v1581
          %1761 = vmatprep.subr.mxu0 0.0
          %1762 = vmatpush1.msra.mxu0 %v1580
          %1763 = vmatprep.subr.mxu0 0.0
          %1764 = vmatpush1.msra.mxu0 %v1579
          %1765 = vmatprep.subr.mxu0 0.0
          %1766 = vmatpush1.msra.mxu0 %v1578
          %1767 = vmatprep.subr.mxu0 0.0
          %1768 = vmatpush2.msra.mxu0 0.0
          %1769 = vmatprep.subr.mxu0 0.0
          %1770 = vmatpush2.msra.mxu0 0.0
          %1771 = vmatprep.subr.mxu0 0.0
          %1772 = vmatpush2.msra.mxu0 0.0
          %1773 = vmatprep.subr.mxu0 0.0
          %1774 = vmatpush2.msra.mxu0 0.0
          %1775 = vmatprep.subr.mxu0 0.0
          %1776 = vmatpush2.msra.mxu0 0.0
          %1777 = vmatprep.subr.mxu0 0.0
          %1778 = vmatpush2.msra.mxu0 0.0
          %1779 = vmatprep.subr.mxu0 0.0
          %1780 = vmatpush2.msra.mxu0 0.0
          %1781 = vmatprep.subr.mxu0 0.0
          %1782 = vmatpush2.msra.mxu0 0.0
          %1783 = vmatprep.subr.mxu0 0.0
          %1784 = vmatpush2.msra.mxu0 0.0
          %1785 = vmatprep.subr.mxu0 0.0
          %1786 = vmatpush2.msra.mxu0 0.0
          %1787 = vmatprep.subr.mxu0 0.0
          %1788 = vmatpush2.msra.mxu0 0.0
          %1789 = vmatprep.subr.mxu0 0.0
          %1790 = vmatpush2.msra.mxu0 0.0
          %1791 = vmatprep.subr.mxu0 0.0
          %1792 = vmatpush2.msra.mxu0 0.0
          %1793 = vmatprep.subr.mxu0 0.0
          %1794 = vmatpush2.msra.mxu0 0.0
          %1795 = vmatprep.subr.mxu0 0.0
          %1796 = vmatpush2.msra.mxu0 0.0
          %1797 = vmatprep.subr.mxu0 0.0
          %1798 = vmatpush2.msra.mxu0 0.0
          %1799 = vmatprep.mubr.f32.mxu0 0.0
          %1800 = vmatmul.mubr.f32.gmra.mxu0 %v1733
          %v1801 = vpop.f32.mrf.mxu0
          %v1802 = vadd.f32 0.0, %v1801
          %v1803 = vpop.f32.mrf.mxu0
          %1804 = vdwg.mxu0
          %v1805 = vadd.f32 %v1729, %v1802
          %v1807 = vsel %vm492, %v1547, 0
          %1809 = vmatprep.subr.mxu0 0.0
          %1810 = vmatpush1.msra.mxu0 0.0
          %1811 = vmatprep.subr.mxu0 0.0
          %1812 = vmatpush1.msra.mxu0 0.0
          %1813 = vmatprep.subr.mxu0 0.0
          %1814 = vmatpush1.msra.mxu0 0.0
          %1815 = vmatprep.subr.mxu0 0.0
          %1816 = vmatpush1.msra.mxu0 0.0
          %1817 = vmatprep.subr.mxu0 0.0
          %1818 = vmatpush1.msra.mxu0 0.0
          %1819 = vmatprep.subr.mxu0 0.0
          %1820 = vmatpush1.msra.mxu0 0.0
          %1821 = vmatprep.subr.mxu0 0.0
          %1822 = vmatpush1.msra.mxu0 0.0
          %1823 = vmatprep.subr.mxu0 0.0
          %1824 = vmatpush1.msra.mxu0 0.0
          %1825 = vmatprep.subr.mxu0 0.0
          %1826 = vmatpush1.msra.mxu0 0.0
          %1827 = vmatprep.subr.mxu0 0.0
          %1828 = vmatpush1.msra.mxu0 0.0
          %1829 = vmatprep.subr.mxu0 0.0
          %1830 = vmatpush1.msra.mxu0 0.0
          %1831 = vmatprep.subr.mxu0 0.0
          %1832 = vmatpush1.msra.mxu0 0.0
          %1833 = vmatprep.subr.mxu0 0.0
          %1834 = vmatpush1.msra.mxu0 %v1585
          %1835 = vmatprep.subr.mxu0 0.0
          %1836 = vmatpush1.msra.mxu0 %v1584
          %1837 = vmatprep.subr.mxu0 0.0
          %1838 = vmatpush1.msra.mxu0 %v1583
          %1839 = vmatprep.subr.mxu0 0.0
          %1840 = vmatpush1.msra.mxu0 %v1582
          %1841 = vmatprep.subr.mxu0 0.0
          %1842 = vmatpush2.msra.mxu0 0.0
          %1843 = vmatprep.subr.mxu0 0.0
          %1844 = vmatpush2.msra.mxu0 0.0
          %1845 = vmatprep.subr.mxu0 0.0
          %1846 = vmatpush2.msra.mxu0 0.0
          %1847 = vmatprep.subr.mxu0 0.0
          %1848 = vmatpush2.msra.mxu0 0.0
          %1849 = vmatprep.subr.mxu0 0.0
          %1850 = vmatpush2.msra.mxu0 0.0
          %1851 = vmatprep.subr.mxu0 0.0
          %1852 = vmatpush2.msra.mxu0 0.0
          %1853 = vmatprep.subr.mxu0 0.0
          %1854 = vmatpush2.msra.mxu0 0.0
          %1855 = vmatprep.subr.mxu0 0.0
          %1856 = vmatpush2.msra.mxu0 0.0
          %1857 = vmatprep.subr.mxu0 0.0
          %1858 = vmatpush2.msra.mxu0 0.0
          %1859 = vmatprep.subr.mxu0 0.0
          %1860 = vmatpush2.msra.mxu0 0.0
          %1861 = vmatprep.subr.mxu0 0.0
          %1862 = vmatpush2.msra.mxu0 0.0
          %1863 = vmatprep.subr.mxu0 0.0
          %1864 = vmatpush2.msra.mxu0 0.0
          %1865 = vmatprep.subr.mxu0 0.0
          %1866 = vmatpush2.msra.mxu0 0.0
          %1867 = vmatprep.subr.mxu0 0.0
          %1868 = vmatpush2.msra.mxu0 0.0
          %1869 = vmatprep.subr.mxu0 0.0
          %1870 = vmatpush2.msra.mxu0 0.0
          %1871 = vmatprep.subr.mxu0 0.0
          %1872 = vmatpush2.msra.mxu0 0.0
          %1873 = vmatprep.mubr.f32.mxu0 0.0
          %1874 = vmatmul.mubr.f32.gmra.mxu0 %v1807
          %v1875 = vpop.f32.mrf.mxu0
          %v1876 = vadd.f32 0.0, %v1875
          %v1877 = vpop.f32.mrf.mxu0
          %1878 = vdwg.mxu0
          %v1879 = vadd.f32 %v1805, %v1876
          %v1880 = vld [vmem:[%s9] sm:$0x1]
          %v1882 = vlaneseq
          %v1883 = vshrl.u32 %v1882, 7
          %v1884 = vsub.s32 0, %v1883
          %v1885 = vrot.slane %v1880, %v1884
          %v1887 = vadd.f32 %v1879, %v1885
          %v1888 = vmax.f32 %v1887, 0.0
          %1889 = vst.msk [vmem:[#allocation16] sm:$0xff] %vm492, %v1888
        $region80: #{tpu_custom_call.1} parent=59 // pred_fallthru
          _
        // Predicated region
        $region81: #{tpu_custom_call.1} parent=59 // pred_check
          %p1890 = pneg %p280
        $region82: #{tpu_custom_call.1} parent=59 // pred_check_branch
          %1892 = sbr.rel (%p1890) target = $region84
        $region83: #{tpu_custom_call.1} parent=59 // pred_region
          %s1894 = ssub.s32 128, 128
          %1895 = vsyncadd [#allocation12], %s1894
          %s1896 = smul.addr %s28, 128
          %s1897 = scalar_lea.hbm %s10, %s1896
          %s1899 = sshll.u32 [#allocation16], 4
          %s1900 = int_to_ptr.vmem [resolvable:$true] %s1899
          %1902 = dma.vmem_to_hbm [thread:$0]  %s1900, 128, %s1897, [#allocation12]
        $region84: #{tpu_custom_call.1} parent=59 // pred_fallthru
          _
        // Predicated region
        $region85: #{tpu_custom_call.1} parent=59 // pred_check
          %p1903 = pneg %p280
        $region86: #{tpu_custom_call.1} parent=59 // pred_check_branch
          %1905 = sbr.rel (%p1903) target = $region88
        $region87: #{tpu_custom_call.1} parent=59 // pred_region
          %1906 = dma.done [#allocation12], 128
        $region88: #{tpu_custom_call.1} parent=59 // pred_fallthru
          _
      $region60: #{tpu_custom_call.1} parent=5 // pred_fallthru
        _
      %p1907 = scmp.le.s32.totalorder 2, %s19
      // Predicated region
      $region89: #{tpu_custom_call.1} parent=5 // pred_check
        %p1908 = pneg %p1907
      $region90: #{tpu_custom_call.1} parent=5 // pred_check_branch
        %1910 = sbr.rel (%p1908) target = $region92
      $region91: #{tpu_custom_call.1} parent=5 // pred_region
        %s1911 = ssub.s32 %s19, 2
      $region92: #{tpu_custom_call.1} parent=5 // pred_fallthru
        _
    $region6: #{tpu_custom_call.1} parent=1 // loop_footer
      %s23 = sadd.s32 1, %s19
    $region7: #{tpu_custom_call.1} parent=1 // loop_footer_branch
      %18 = sbr.rel target = $region3
    $region8: #{tpu_custom_call.1} parent=1 // loop_exit
      _
    %1912 = vsyncpa [#allocation11], 1
    %s1913 = scalar_lea.sflag [#allocation11], 1
    %1914 = vsyncpa %s1913, 1
    %1915 = vsyncpa [#allocation14], 1
    %1916 = vsyncpa [#allocation12], 1
    %s1917 = scalar_lea.sflag [#allocation12], 1
    %1918 = vsyncpa %s1917, 1

</llo_original>
